<compile_context>
chip_gen: v7x
topology: tpu7x:2x2x1
jax: 0.10.0
libtpu: 0.0.40
codegen_flags: <defaults>
</compile_context>

<pallas_src>
import functools

import jax
import jax.numpy as jnp
import numpy as np
from jax.experimental import pallas as pl
from jax.experimental.pallas import tpu as pltpu

# ----------------------------- model sizes ---------------------------------
VOCAB = 50
EMB = 32          # embedding_dim
RNN_H = 32        # rnn_hidden_dim
HID = 64          # hidden_dim
NUM_CLASSES = 4
B = 8             # batch
T = 16            # max sequence length
PADDING_IDX = 0


# ------------------------------ Pallas kernel ------------------------------
def gru_kernel(T_, B_, H_,
               x_ref, mask_ref, wih_ref, b_gi_ref, whh_ref, bhh_n_ref,
               head_w_ref, head_b_ref, out_ref, gi_ref):
    H2 = 2 * H_
    H4 = 4 * H_

    # Hoisted fused input projection: one (T*B, 2E) x (2E, 6H) matmul producing both
    # directions' gate pre-activations in the fused lane order [r_f,r_b,z_f,z_b,n_f,n_b].
    # b_ih (all gates) and b_hh (r,z gates) are pre-folded into b_gi; b_hh for the n
    # gate must stay inside the r * (...) term to match PyTorch.
    gi_ref[...] = (jnp.dot(x_ref[...], wih_ref[...],
                           preferred_element_type=jnp.float32) + b_gi_ref[...])

    whh = whh_ref[...]                                         # (2H, 6H) block-diagonal
    bhh_n = jnp.broadcast_to(bhh_n_ref[...], (B_, H2))         # loop-invariant, hoisted

    h = jnp.zeros((B_, H2), jnp.float32)                       # h_cat = [h_f | h_b]

    # Fully-unrolled fused recurrence. Each step: one (B,2H)x(2H,6H) matmul, one
    # 128-lane sigmoid, one 64-lane tanh, one freeze madd. Gate buffer lives in VMEM
    # scratch; each step is a static (B, 6H) sublane-range load.
    for t in range(T_):
        lo = t * B_
        g_t = gi_ref[lo:lo + B_, :]                            # (B, 6H)
        m_t = mask_ref[lo:lo + B_, :]                          # (B, 2H)
        gh = jnp.dot(h, whh, preferred_element_type=jnp.float32)   # (B, 6H)
        rz = jax.nn.sigmoid(g_t[:, :H4] + gh[:, :H4])          # (B, 4H): r_f,r_b,z_f,z_b
        r = rz[:, :H2]
        z = rz[:, H2:H4]
        n = jnp.tanh(g_t[:, H4:] + r * (gh[:, H4:] + bhh_n))   # (B, 2H): n_f,n_b
        h_new = n + z * (h - n)                                 # == (1-z)*n + z*h
        h = h + m_t * (h_new - h)                               # packed-seq freeze, no cmp

    # Head: fc1 and fc2 collapsed host-side (no nonlinearity between them; dropout is
    # identity in eval).  h is already [h_f | h_b], so no concat needed.
    out_ref[...] = (jnp.dot(h, head_w_ref[...],
                            preferred_element_type=jnp.float32) + head_b_ref[...])


# ------------------------------ wrapper -------------------------------------
@jax.jit
def gru_forward(tokens, seq_lens, params):
    Bsz, Tlen = tokens.shape
    H = RNN_H

    # Embedding gather is glue (plain JAX); padding_idx row of the table is zero.
    emb = params["embedding"][tokens].astype(jnp.float32)               # (B, T, E)
    x_tm = jnp.transpose(emb, (1, 0, 2))                                # (T, B, E)
    x_rev = x_tm[::-1]                                                  # bwd dir pre-reversed
    x_cat = jnp.concatenate([x_tm, x_rev], axis=-1).reshape(Tlen * Bsz, 2 * EMB)

    # Packed-sequence masks, already broadcast to the fused (T*B, 2H) lane layout:
    # forward half valid where t < len, backward half valid where (T-1-t) < len.
    t_ids = jnp.arange(Tlen, dtype=jnp.int32)[:, None]                  # (T, 1)
    lens = seq_lens.astype(jnp.int32)[None, :]                          # (1, B)
    m_f = (t_ids < lens).astype(jnp.float32)                            # (T, B)
    m_b = ((Tlen - 1 - t_ids) < lens).astype(jnp.float32)               # (T, B)
    m_f3 = jnp.broadcast_to(m_f[:, :, None], (Tlen, Bsz, H))
    m_b3 = jnp.broadcast_to(m_b[:, :, None], (Tlen, Bsz, H))
    mask_cat = jnp.concatenate([m_f3, m_b3], axis=-1).reshape(Tlen * Bsz, 2 * H)

    # --- fused weight packing: block-diagonal, gate order [r_f,r_b,z_f,z_b,n_f,n_b] ---
    def split3(w):                                                      # (*, 3H) -> 3x(*, H)
        return w[:, :H], w[:, H:2 * H], w[:, 2 * H:3 * H]

    zE = jnp.zeros((EMB, H), jnp.float32)
    zH = jnp.zeros((H, H), jnp.float32)

    rif, zif, nif = split3(params["wih_f"])
    rib, zib, nib = split3(params["wih_b"])
    wih_cat = jnp.concatenate([
        jnp.concatenate([rif, zE, zif, zE, nif, zE], axis=1),
        jnp.concatenate([zE, rib, zE, zib, zE, nib], axis=1),
    ], axis=0)                                                          # (2E, 6H)

    rhf, zhf, nhf = split3(params["whh_f"])
    rhb, zhb, nhb = split3(params["whh_b"])
    whh_cat = jnp.concatenate([
        jnp.concatenate([rhf, zH, zhf, zH, nhf, zH], axis=1),
        jnp.concatenate([zH, rhb, zH, zhb, zH, nhb], axis=1),
    ], axis=0)                                                          # (2H, 6H)

    brif, bzif, bnif = split3(params["bih_f"])
    brib, bzib, bnib = split3(params["bih_b"])
    brhf, bzhf, bnhf = split3(params["bhh_f"])
    brhb, bzhb, bnhb = split3(params["bhh_b"])
    # b_ih (all gates) + b_hh (r,z only) folded into the hoisted projection.
    b_gi_cat = jnp.concatenate(
        [brif + brhf, brib + brhb, bzif + bzhf, bzib + bzhb, bnif, bnib], axis=1)  # (1, 6H)
    bhh_n_cat = jnp.concatenate([bnhf, bnhb], axis=1)                   # (1, 2H)

    # Collapsed head: fc1 -> dropout(eval identity) -> fc2 has no nonlinearity, so the
    # composition is exact.
    # TODO(synk): dropout is a no-op in eval mode; training-mode dropout not reproduced.
    head_w = params["fc1_w"] @ params["fc2_w"]                          # (2H, NC)
    head_b = params["fc1_b"] @ params["fc2_w"] + params["fc2_b"]        # (1, NC)

    vmem = pl.BlockSpec(memory_space=pltpu.MemorySpace.VMEM)
    out = pl.pallas_call(
        functools.partial(gru_kernel, Tlen, Bsz, H),
        out_shape=jax.ShapeDtypeStruct((Bsz, NUM_CLASSES), jnp.float32),
        in_specs=[vmem] * 8,
        out_specs=vmem,
        scratch_shapes=[pltpu.VMEM((Tlen * Bsz, 6 * H), jnp.float32)],
    )(x_cat, mask_cat, wih_cat, b_gi_cat, whh_cat, bhh_n_cat, head_w, head_b)
    return out


# ------------------------- pure-JAX reference --------------------------------
def gru_reference(tokens, seq_lens, params):
    emb = params["embedding"][tokens]                        # (B, T, E)
    lens = seq_lens.astype(jnp.int32)
    H = RNN_H

    def cell(x_t, h, wih, whh, bih, bhh):
        gi = x_t @ wih + bih
        gh = h @ whh + bhh
        r = jax.nn.sigmoid(gi[:, 0:H] + gh[:, 0:H])
        z = jax.nn.sigmoid(gi[:, H:2 * H] + gh[:, H:2 * H])
        n = jnp.tanh(gi[:, 2 * H:3 * H] + r * gh[:, 2 * H:3 * H])
        return (1.0 - z) * n + z * h

    h_f = jnp.zeros((tokens.shape[0], H), jnp.float32)
    for t in range(T):
        h_new = cell(emb[:, t, :], h_f, params["wih_f"], params["whh_f"],
                     params["bih_f"], params["bhh_f"])
        h_f = jnp.where((t < lens)[:, None], h_new, h_f)

    h_b = jnp.zeros((tokens.shape[0], H), jnp.float32)
    for t in range(T - 1, -1, -1):
        h_new = cell(emb[:, t, :], h_b, params["wih_b"], params["whh_b"],
                     params["bih_b"], params["bhh_b"])
        h_b = jnp.where((t < lens)[:, None], h_new, h_b)

    z = jnp.concatenate([h_f, h_b], axis=1)
    z = z @ params["fc1_w"] + params["fc1_b"]
    z = z @ params["fc2_w"] + params["fc2_b"]
    return z


# ------------------------------- params --------------------------------------
def init_params(key):
    ks = jax.random.split(key, 16)
    s_emb = 1.0
    s_rnn = 1.0 / np.sqrt(RNN_H)
    s_fc1 = 1.0 / np.sqrt(2 * RNN_H)
    s_fc2 = 1.0 / np.sqrt(HID)

    embedding = jax.random.normal(ks[0], (VOCAB, EMB), jnp.float32) * s_emb
    embedding = embedding.at[PADDING_IDX].set(0.0)           # padding_idx row zeroed

    def u(k, shape, s):
        return jax.random.uniform(k, shape, jnp.float32, -s, s)

    params = dict(
        embedding=embedding,
        # stored transposed: (in_dim, 3H) / (H, 3H); biases as (1, 3H); gate order r,z,n
        wih_f=u(ks[1], (EMB, 3 * RNN_H), s_rnn),
        whh_f=u(ks[2], (RNN_H, 3 * RNN_H), s_rnn),
        bih_f=u(ks[3], (1, 3 * RNN_H), s_rnn),
        bhh_f=u(ks[4], (1, 3 * RNN_H), s_rnn),
        wih_b=u(ks[5], (EMB, 3 * RNN_H), s_rnn),
        whh_b=u(ks[6], (RNN_H, 3 * RNN_H), s_rnn),
        bih_b=u(ks[7], (1, 3 * RNN_H), s_rnn),
        bhh_b=u(ks[8], (1, 3 * RNN_H), s_rnn),
        fc1_w=u(ks[9], (2 * RNN_H, HID), s_fc1),
        fc1_b=u(ks[10], (1, HID), s_fc1),
        fc2_w=u(ks[11], (HID, NUM_CLASSES), s_fc2),
        fc2_b=u(ks[12], (1, NUM_CLASSES), s_fc2),
    )
    return params


# --------------------------------- main ---------------------------------------
if __name__ == "__main__":
    key = jax.random.PRNGKey(0)
    pkey, tkey, lkey = jax.random.split(key, 3)

    params = init_params(pkey)

    # token ids (B, T); padded positions beyond seq_len are ignored via masking
    tokens = jax.random.randint(tkey, (B, T), 1, VOCAB, dtype=jnp.int32)
    seq_lens = jax.random.randint(lkey, (B,), 1, T + 1, dtype=jnp.int32)

    out = gru_forward(tokens, seq_lens, params)
    out = jax.block_until_ready(out)

    ref = gru_reference(tokens, seq_lens, params)
    np.testing.assert_allclose(np.asarray(out), np.asarray(ref), rtol=1e-4, atol=1e-4)

    print("KERNEL_OK")
</pallas_src>

<mosaic_0001>
module attributes {stable_mosaic.version = 11 : i64} {
  func.func @gru_kernel(%arg0: memref<128x64xf32, #tpu.memory_space<vmem>>, %arg1: memref<128x64xf32, #tpu.memory_space<vmem>>, %arg2: memref<64x192xf32, #tpu.memory_space<vmem>>, %arg3: memref<1x192xf32, #tpu.memory_space<vmem>>, %arg4: memref<64x192xf32, #tpu.memory_space<vmem>>, %arg5: memref<1x64xf32, #tpu.memory_space<vmem>>, %arg6: memref<64x4xf32, #tpu.memory_space<vmem>>, %arg7: memref<1x4xf32, #tpu.memory_space<vmem>>, %arg8: memref<8x4xf32, #tpu.memory_space<vmem>>, %arg9: memref<128x192xf32, #tpu.memory_space<vmem>>) attributes {dimension_semantics = [], scalar_prefetch = 0 : i64, scratch_operands = 1 : i64, tpu.core_type = #tpu.core_type<tc>} {
    %c0 = arith.constant 0 : index
    %c0_0 = arith.constant 0 : index
    %0 = vector.load %arg0[%c0, %c0_0] : memref<128x64xf32, #tpu.memory_space<vmem>>, vector<128x64xf32>
    %c0_1 = arith.constant 0 : index
    %c0_2 = arith.constant 0 : index
    %1 = vector.load %arg2[%c0_1, %c0_2] : memref<64x192xf32, #tpu.memory_space<vmem>>, vector<64x192xf32>
    %cst = arith.constant dense<0.000000e+00> : vector<128x192xf32>
    %2 = tpu.matmul %0, %1, %cst {dimension_numbers = #tpu.dot_dimension_numbers<[1], [0], [0], [1], [0, 0, 1, 1], [], []>} : vector<128x64xf32>, vector<64x192xf32>, vector<128x192xf32> -> vector<128x192xf32>
    %c0_3 = arith.constant 0 : index
    %c0_4 = arith.constant 0 : index
    %3 = vector.load %arg3[%c0_3, %c0_4] : memref<1x192xf32, #tpu.memory_space<vmem>>, vector<1x192xf32>
    %4 = vector.broadcast %3 : vector<1x192xf32> to vector<128x192xf32>
    %5 = arith.addf %2, %4 : vector<128x192xf32>
    %c0_5 = arith.constant 0 : index
    %c0_6 = arith.constant 0 : index
    %6 = vector.load %arg9[%c0_5, %c0_6] : memref<128x192xf32, #tpu.memory_space<vmem>>, vector<128x192xf32>
    tpu.vector_store %arg9[%c0_5, %c0_6], %5 {strides = array<i32>} : memref<128x192xf32, #tpu.memory_space<vmem>>, vector<128x192xf32>,
    %c0_7 = arith.constant 0 : index
    %c0_8 = arith.constant 0 : index
    %7 = vector.load %arg4[%c0_7, %c0_8] : memref<64x192xf32, #tpu.memory_space<vmem>>, vector<64x192xf32>
    %c0_9 = arith.constant 0 : index
    %c0_10 = arith.constant 0 : index
    %8 = vector.load %arg5[%c0_9, %c0_10] : memref<1x64xf32, #tpu.memory_space<vmem>>, vector<1x64xf32>
    %9 = vector.shape_cast %8 : vector<1x64xf32> to vector<1x64xf32>
    %10 = vector.broadcast %9 : vector<1x64xf32> to vector<8x64xf32>
    %cst_11 = arith.constant 0.000000e+00 : f32
    %11 = vector.broadcast %cst_11 : f32 to vector<8x64xf32>
    %c0_12 = arith.constant 0 : index
    %c0_13 = arith.constant 0 : index
    %12 = vector.load %arg9[%c0_12, %c0_13] : memref<128x192xf32, #tpu.memory_space<vmem>>, vector<8x192xf32>
    %c0_14 = arith.constant 0 : index
    %c0_15 = arith.constant 0 : index
    %13 = vector.load %arg1[%c0_14, %c0_15] : memref<128x64xf32, #tpu.memory_space<vmem>>, vector<8x64xf32>
    %cst_16 = arith.constant dense<0.000000e+00> : vector<8x192xf32>
    %14 = tpu.matmul %11, %7, %cst_16 {dimension_numbers = #tpu.dot_dimension_numbers<[1], [0], [0], [1], [0, 0, 1, 1], [], []>} : vector<8x64xf32>, vector<64x192xf32>, vector<8x192xf32> -> vector<8x192xf32>
    %15 = vector.extract_strided_slice %12 {offsets = [0, 0], sizes = [8, 128], strides = [1, 1]} : vector<8x192xf32> to vector<8x128xf32>
    %16 = vector.extract_strided_slice %14 {offsets = [0, 0], sizes = [8, 128], strides = [1, 1]} : vector<8x192xf32> to vector<8x128xf32>
    %17 = arith.addf %15, %16 : vector<8x128xf32>
    %18 = arith.negf %17 : vector<8x128xf32>
    %19 = math.exp %18 : vector<8x128xf32>
    %cst_17 = arith.constant 1.000000e+00 : f32
    %20 = vector.broadcast %cst_17 : f32 to vector<8x128xf32>
    %21 = arith.addf %20, %19 : vector<8x128xf32>
    %22 = arith.divf %20, %21 : vector<8x128xf32>
    %23 = vector.extract_strided_slice %22 {offsets = [0, 0], sizes = [8, 64], strides = [1, 1]} : vector<8x128xf32> to vector<8x64xf32>
    %24 = vector.extract_strided_slice %22 {offsets = [0, 64], sizes = [8, 64], strides = [1, 1]} : vector<8x128xf32> to vector<8x64xf32>
    %25 = vector.extract_strided_slice %12 {offsets = [0, 128], sizes = [8, 64], strides = [1, 1]} : vector<8x192xf32> to vector<8x64xf32>
    %26 = vector.extract_strided_slice %14 {offsets = [0, 128], sizes = [8, 64], strides = [1, 1]} : vector<8x192xf32> to vector<8x64xf32>
    %27 = arith.addf %26, %10 : vector<8x64xf32>
    %28 = arith.mulf %23, %27 : vector<8x64xf32>
    %29 = arith.addf %25, %28 : vector<8x64xf32>
    %30 = math.tanh %29 : vector<8x64xf32>
    %31 = arith.subf %11, %30 : vector<8x64xf32>
    %32 = arith.mulf %24, %31 : vector<8x64xf32>
    %33 = arith.addf %30, %32 : vector<8x64xf32>
    %34 = arith.subf %33, %11 : vector<8x64xf32>
    %35 = arith.mulf %13, %34 : vector<8x64xf32>
    %36 = arith.addf %11, %35 : vector<8x64xf32>
    %c8 = arith.constant 8 : index
    %c0_18 = arith.constant 0 : index
    %37 = vector.load %arg9[%c8, %c0_18] : memref<128x192xf32, #tpu.memory_space<vmem>>, vector<8x192xf32>
    %c8_19 = arith.constant 8 : index
    %c0_20 = arith.constant 0 : index
    %38 = vector.load %arg1[%c8_19, %c0_20] : memref<128x64xf32, #tpu.memory_space<vmem>>, vector<8x64xf32>
    %cst_21 = arith.constant dense<0.000000e+00> : vector<8x192xf32>
    %39 = tpu.matmul %36, %7, %cst_21 {dimension_numbers = #tpu.dot_dimension_numbers<[1], [0], [0], [1], [0, 0, 1, 1], [], []>} : vector<8x64xf32>, vector<64x192xf32>, vector<8x192xf32> -> vector<8x192xf32>
    %40 = vector.extract_strided_slice %37 {offsets = [0, 0], sizes = [8, 128], strides = [1, 1]} : vector<8x192xf32> to vector<8x128xf32>
    %41 = vector.extract_strided_slice %39 {offsets = [0, 0], sizes = [8, 128], strides = [1, 1]} : vector<8x192xf32> to vector<8x128xf32>
    %42 = arith.addf %40, %41 : vector<8x128xf32>
    %43 = arith.negf %42 : vector<8x128xf32>
    %44 = math.exp %43 : vector<8x128xf32>
    %cst_22 = arith.constant 1.000000e+00 : f32
    %45 = vector.broadcast %cst_22 : f32 to vector<8x128xf32>
    %46 = arith.addf %45, %44 : vector<8x128xf32>
    %47 = arith.divf %45, %46 : vector<8x128xf32>
    %48 = vector.extract_strided_slice %47 {offsets = [0, 0], sizes = [8, 64], strides = [1, 1]} : vector<8x128xf32> to vector<8x64xf32>
    %49 = vector.extract_strided_slice %47 {offsets = [0, 64], sizes = [8, 64], strides = [1, 1]} : vector<8x128xf32> to vector<8x64xf32>
    %50 = vector.extract_strided_slice %37 {offsets = [0, 128], sizes = [8, 64], strides = [1, 1]} : vector<8x192xf32> to vector<8x64xf32>
    %51 = vector.extract_strided_slice %39 {offsets = [0, 128], sizes = [8, 64], strides = [1, 1]} : vector<8x192xf32> to vector<8x64xf32>
    %52 = arith.addf %51, %10 : vector<8x64xf32>
    %53 = arith.mulf %48, %52 : vector<8x64xf32>
    %54 = arith.addf %50, %53 : vector<8x64xf32>
    %55 = math.tanh %54 : vector<8x64xf32>
    %56 = arith.subf %36, %55 : vector<8x64xf32>
    %57 = arith.mulf %49, %56 : vector<8x64xf32>
    %58 = arith.addf %55, %57 : vector<8x64xf32>
    %59 = arith.subf %58, %36 : vector<8x64xf32>
    %60 = arith.mulf %38, %59 : vector<8x64xf32>
    %61 = arith.addf %36, %60 : vector<8x64xf32>
    %c16 = arith.constant 16 : index
    %c0_23 = arith.constant 0 : index
    %62 = vector.load %arg9[%c16, %c0_23] : memref<128x192xf32, #tpu.memory_space<vmem>>, vector<8x192xf32>
    %c16_24 = arith.constant 16 : index
    %c0_25 = arith.constant 0 : index
    %63 = vector.load %arg1[%c16_24, %c0_25] : memref<128x64xf32, #tpu.memory_space<vmem>>, vector<8x64xf32>
    %cst_26 = arith.constant dense<0.000000e+00> : vector<8x192xf32>
    %64 = tpu.matmul %61, %7, %cst_26 {dimension_numbers = #tpu.dot_dimension_numbers<[1], [0], [0], [1], [0, 0, 1, 1], [], []>} : vector<8x64xf32>, vector<64x192xf32>, vector<8x192xf32> -> vector<8x192xf32>
    %65 = vector.extract_strided_slice %62 {offsets = [0, 0], sizes = [8, 128], strides = [1, 1]} : vector<8x192xf32> to vector<8x128xf32>
    %66 = vector.extract_strided_slice %64 {offsets = [0, 0], sizes = [8, 128], strides = [1, 1]} : vector<8x192xf32> to vector<8x128xf32>
    %67 = arith.addf %65, %66 : vector<8x128xf32>
    %68 = arith.negf %67 : vector<8x128xf32>
    %69 = math.exp %68 : vector<8x128xf32>
    %cst_27 = arith.constant 1.000000e+00 : f32
    %70 = vector.broadcast %cst_27 : f32 to vector<8x128xf32>
    %71 = arith.addf %70, %69 : vector<8x128xf32>
    %72 = arith.divf %70, %71 : vector<8x128xf32>
    %73 = vector.extract_strided_slice %72 {offsets = [0, 0], sizes = [8, 64], strides = [1, 1]} : vector<8x128xf32> to vector<8x64xf32>
    %74 = vector.extract_strided_slice %72 {offsets = [0, 64], sizes = [8, 64], strides = [1, 1]} : vector<8x128xf32> to vector<8x64xf32>
    %75 = vector.extract_strided_slice %62 {offsets = [0, 128], sizes = [8, 64], strides = [1, 1]} : vector<8x192xf32> to vector<8x64xf32>
    %76 = vector.extract_strided_slice %64 {offsets = [0, 128], sizes = [8, 64], strides = [1, 1]} : vector<8x192xf32> to vector<8x64xf32>
    %77 = arith.addf %76, %10 : vector<8x64xf32>
    %78 = arith.mulf %73, %77 : vector<8x64xf32>
    %79 = arith.addf %75, %78 : vector<8x64xf32>
    %80 = math.tanh %79 : vector<8x64xf32>
    %81 = arith.subf %61, %80 : vector<8x64xf32>
    %82 = arith.mulf %74, %81 : vector<8x64xf32>
    %83 = arith.addf %80, %82 : vector<8x64xf32>
    %84 = arith.subf %83, %61 : vector<8x64xf32>
    %85 = arith.mulf %63, %84 : vector<8x64xf32>
    %86 = arith.addf %61, %85 : vector<8x64xf32>
    %c24 = arith.constant 24 : index
    %c0_28 = arith.constant 0 : index
    %87 = vector.load %arg9[%c24, %c0_28] : memref<128x192xf32, #tpu.memory_space<vmem>>, vector<8x192xf32>
    %c24_29 = arith.constant 24 : index
    %c0_30 = arith.constant 0 : index
    %88 = vector.load %arg1[%c24_29, %c0_30] : memref<128x64xf32, #tpu.memory_space<vmem>>, vector<8x64xf32>
    %cst_31 = arith.constant dense<0.000000e+00> : vector<8x192xf32>
    %89 = tpu.matmul %86, %7, %cst_31 {dimension_numbers = #tpu.dot_dimension_numbers<[1], [0], [0], [1], [0, 0, 1, 1], [], []>} : vector<8x64xf32>, vector<64x192xf32>, vector<8x192xf32> -> vector<8x192xf32>
    %90 = vector.extract_strided_slice %87 {offsets = [0, 0], sizes = [8, 128], strides = [1, 1]} : vector<8x192xf32> to vector<8x128xf32>
    %91 = vector.extract_strided_slice %89 {offsets = [0, 0], sizes = [8, 128], strides = [1, 1]} : vector<8x192xf32> to vector<8x128xf32>
    %92 = arith.addf %90, %91 : vector<8x128xf32>
    %93 = arith.negf %92 : vector<8x128xf32>
    %94 = math.exp %93 : vector<8x128xf32>
    %cst_32 = arith.constant 1.000000e+00 : f32
    %95 = vector.broadcast %cst_32 : f32 to vector<8x128xf32>
    %96 = arith.addf %95, %94 : vector<8x128xf32>
    %97 = arith.divf %95, %96 : vector<8x128xf32>
    %98 = vector.extract_strided_slice %97 {offsets = [0, 0], sizes = [8, 64], strides = [1, 1]} : vector<8x128xf32> to vector<8x64xf32>
    %99 = vector.extract_strided_slice %97 {offsets = [0, 64], sizes = [8, 64], strides = [1, 1]} : vector<8x128xf32> to vector<8x64xf32>
    %100 = vector.extract_strided_slice %87 {offsets = [0, 128], sizes = [8, 64], strides = [1, 1]} : vector<8x192xf32> to vector<8x64xf32>
    %101 = vector.extract_strided_slice %89 {offsets = [0, 128], sizes = [8, 64], strides = [1, 1]} : vector<8x192xf32> to vector<8x64xf32>
    %102 = arith.addf %101, %10 : vector<8x64xf32>
    %103 = arith.mulf %98, %102 : vector<8x64xf32>
    %104 = arith.addf %100, %103 : vector<8x64xf32>
    %105 = math.tanh %104 : vector<8x64xf32>
    %106 = arith.subf %86, %105 : vector<8x64xf32>
    %107 = arith.mulf %99, %106 : vector<8x64xf32>
    %108 = arith.addf %105, %107 : vector<8x64xf32>
    %109 = arith.subf %108, %86 : vector<8x64xf32>
    %110 = arith.mulf %88, %109 : vector<8x64xf32>
    %111 = arith.addf %86, %110 : vector<8x64xf32>
    %c32 = arith.constant 32 : index
    %c0_33 = arith.constant 0 : index
    %112 = vector.load %arg9[%c32, %c0_33] : memref<128x192xf32, #tpu.memory_space<vmem>>, vector<8x192xf32>
    %c32_34 = arith.constant 32 : index
    %c0_35 = arith.constant 0 : index
    %113 = vector.load %arg1[%c32_34, %c0_35] : memref<128x64xf32, #tpu.memory_space<vmem>>, vector<8x64xf32>
    %cst_36 = arith.constant dense<0.000000e+00> : vector<8x192xf32>
    %114 = tpu.matmul %111, %7, %cst_36 {dimension_numbers = #tpu.dot_dimension_numbers<[1], [0], [0], [1], [0, 0, 1, 1], [], []>} : vector<8x64xf32>, vector<64x192xf32>, vector<8x192xf32> -> vector<8x192xf32>
    %115 = vector.extract_strided_slice %112 {offsets = [0, 0], sizes = [8, 128], strides = [1, 1]} : vector<8x192xf32> to vector<8x128xf32>
    %116 = vector.extract_strided_slice %114 {offsets = [0, 0], sizes = [8, 128], strides = [1, 1]} : vector<8x192xf32> to vector<8x128xf32>
    %117 = arith.addf %115, %116 : vector<8x128xf32>
    %118 = arith.negf %117 : vector<8x128xf32>
    %119 = math.exp %118 : vector<8x128xf32>
    %cst_37 = arith.constant 1.000000e+00 : f32
    %120 = vector.broadcast %cst_37 : f32 to vector<8x128xf32>
    %121 = arith.addf %120, %119 : vector<8x128xf32>
    %122 = arith.divf %120, %121 : vector<8x128xf32>
    %123 = vector.extract_strided_slice %122 {offsets = [0, 0], sizes = [8, 64], strides = [1, 1]} : vector<8x128xf32> to vector<8x64xf32>
    %124 = vector.extract_strided_slice %122 {offsets = [0, 64], sizes = [8, 64], strides = [1, 1]} : vector<8x128xf32> to vector<8x64xf32>
    %125 = vector.extract_strided_slice %112 {offsets = [0, 128], sizes = [8, 64], strides = [1, 1]} : vector<8x192xf32> to vector<8x64xf32>
    %126 = vector.extract_strided_slice %114 {offsets = [0, 128], sizes = [8, 64], strides = [1, 1]} : vector<8x192xf32> to vector<8x64xf32>
    %127 = arith.addf %126, %10 : vector<8x64xf32>
    %128 = arith.mulf %123, %127 : vector<8x64xf32>
    %129 = arith.addf %125, %128 : vector<8x64xf32>
    %130 = math.tanh %129 : vector<8x64xf32>
    %131 = arith.subf %111, %130 : vector<8x64xf32>
    %132 = arith.mulf %124, %131 : vector<8x64xf32>
    %133 = arith.addf %130, %132 : vector<8x64xf32>
    %134 = arith.subf %133, %111 : vector<8x64xf32>
    %135 = arith.mulf %113, %134 : vector<8x64xf32>
    %136 = arith.addf %111, %135 : vector<8x64xf32>
    %c40 = arith.constant 40 : index
    %c0_38 = arith.constant 0 : index
    %137 = vector.load %arg9[%c40, %c0_38] : memref<128x192xf32, #tpu.memory_space<vmem>>, vector<8x192xf32>
    %c40_39 = arith.constant 40 : index
    %c0_40 = arith.constant 0 : index
    %138 = vector.load %arg1[%c40_39, %c0_40] : memref<128x64xf32, #tpu.memory_space<vmem>>, vector<8x64xf32>
    %cst_41 = arith.constant dense<0.000000e+00> : vector<8x192xf32>
    %139 = tpu.matmul %136, %7, %cst_41 {dimension_numbers = #tpu.dot_dimension_numbers<[1], [0], [0], [1], [0, 0, 1, 1], [], []>} : vector<8x64xf32>, vector<64x192xf32>, vector<8x192xf32> -> vector<8x192xf32>
    %140 = vector.extract_strided_slice %137 {offsets = [0, 0], sizes = [8, 128], strides = [1, 1]} : vector<8x192xf32> to vector<8x128xf32>
    %141 = vector.extract_strided_slice %139 {offsets = [0, 0], sizes = [8, 128], strides = [1, 1]} : vector<8x192xf32> to vector<8x128xf32>
    %142 = arith.addf %140, %141 : vector<8x128xf32>
    %143 = arith.negf %142 : vector<8x128xf32>
    %144 = math.exp %143 : vector<8x128xf32>
    %cst_42 = arith.constant 1.000000e+00 : f32
    %145 = vector.broadcast %cst_42 : f32 to vector<8x128xf32>
    %146 = arith.addf %145, %144 : vector<8x128xf32>
    %147 = arith.divf %145, %146 : vector<8x128xf32>
    %148 = vector.extract_strided_slice %147 {offsets = [0, 0], sizes = [8, 64], strides = [1, 1]} : vector<8x128xf32> to vector<8x64xf32>
    %149 = vector.extract_strided_slice %147 {offsets = [0, 64], sizes = [8, 64], strides = [1, 1]} : vector<8x128xf32> to vector<8x64xf32>
    %150 = vector.extract_strided_slice %137 {offsets = [0, 128], sizes = [8, 64], strides = [1, 1]} : vector<8x192xf32> to vector<8x64xf32>
    %151 = vector.extract_strided_slice %139 {offsets = [0, 128], sizes = [8, 64], strides = [1, 1]} : vector<8x192xf32> to vector<8x64xf32>
    %152 = arith.addf %151, %10 : vector<8x64xf32>
    %153 = arith.mulf %148, %152 : vector<8x64xf32>
    %154 = arith.addf %150, %153 : vector<8x64xf32>
    %155 = math.tanh %154 : vector<8x64xf32>
    %156 = arith.subf %136, %155 : vector<8x64xf32>
    %157 = arith.mulf %149, %156 : vector<8x64xf32>
    %158 = arith.addf %155, %157 : vector<8x64xf32>
    %159 = arith.subf %158, %136 : vector<8x64xf32>
    %160 = arith.mulf %138, %159 : vector<8x64xf32>
    %161 = arith.addf %136, %160 : vector<8x64xf32>
    %c48 = arith.constant 48 : index
    %c0_43 = arith.constant 0 : index
    %162 = vector.load %arg9[%c48, %c0_43] : memref<128x192xf32, #tpu.memory_space<vmem>>, vector<8x192xf32>
    %c48_44 = arith.constant 48 : index
    %c0_45 = arith.constant 0 : index
    %163 = vector.load %arg1[%c48_44, %c0_45] : memref<128x64xf32, #tpu.memory_space<vmem>>, vector<8x64xf32>
    %cst_46 = arith.constant dense<0.000000e+00> : vector<8x192xf32>
    %164 = tpu.matmul %161, %7, %cst_46 {dimension_numbers = #tpu.dot_dimension_numbers<[1], [0], [0], [1], [0, 0, 1, 1], [], []>} : vector<8x64xf32>, vector<64x192xf32>, vector<8x192xf32> -> vector<8x192xf32>
    %165 = vector.extract_strided_slice %162 {offsets = [0, 0], sizes = [8, 128], strides = [1, 1]} : vector<8x192xf32> to vector<8x128xf32>
    %166 = vector.extract_strided_slice %164 {offsets = [0, 0], sizes = [8, 128], strides = [1, 1]} : vector<8x192xf32> to vector<8x128xf32>
    %167 = arith.addf %165, %166 : vector<8x128xf32>
    %168 = arith.negf %167 : vector<8x128xf32>
    %169 = math.exp %168 : vector<8x128xf32>
    %cst_47 = arith.constant 1.000000e+00 : f32
    %170 = vector.broadcast %cst_47 : f32 to vector<8x128xf32>
    %171 = arith.addf %170, %169 : vector<8x128xf32>
    %172 = arith.divf %170, %171 : vector<8x128xf32>
    %173 = vector.extract_strided_slice %172 {offsets = [0, 0], sizes = [8, 64], strides = [1, 1]} : vector<8x128xf32> to vector<8x64xf32>
    %174 = vector.extract_strided_slice %172 {offsets = [0, 64], sizes = [8, 64], strides = [1, 1]} : vector<8x128xf32> to vector<8x64xf32>
    %175 = vector.extract_strided_slice %162 {offsets = [0, 128], sizes = [8, 64], strides = [1, 1]} : vector<8x192xf32> to vector<8x64xf32>
    %176 = vector.extract_strided_slice %164 {offsets = [0, 128], sizes = [8, 64], strides = [1, 1]} : vector<8x192xf32> to vector<8x64xf32>
    %177 = arith.addf %176, %10 : vector<8x64xf32>
    %178 = arith.mulf %173, %177 : vector<8x64xf32>
    %179 = arith.addf %175, %178 : vector<8x64xf32>
    %180 = math.tanh %179 : vector<8x64xf32>
    %181 = arith.subf %161, %180 : vector<8x64xf32>
    %182 = arith.mulf %174, %181 : vector<8x64xf32>
    %183 = arith.addf %180, %182 : vector<8x64xf32>
    %184 = arith.subf %183, %161 : vector<8x64xf32>
    %185 = arith.mulf %163, %184 : vector<8x64xf32>
    %186 = arith.addf %161, %185 : vector<8x64xf32>
    %c56 = arith.constant 56 : index
    %c0_48 = arith.constant 0 : index
    %187 = vector.load %arg9[%c56, %c0_48] : memref<128x192xf32, #tpu.memory_space<vmem>>, vector<8x192xf32>
    %c56_49 = arith.constant 56 : index
    %c0_50 = arith.constant 0 : index
    %188 = vector.load %arg1[%c56_49, %c0_50] : memref<128x64xf32, #tpu.memory_space<vmem>>, vector<8x64xf32>
    %cst_51 = arith.constant dense<0.000000e+00> : vector<8x192xf32>
    %189 = tpu.matmul %186, %7, %cst_51 {dimension_numbers = #tpu.dot_dimension_numbers<[1], [0], [0], [1], [0, 0, 1, 1], [], []>} : vector<8x64xf32>, vector<64x192xf32>, vector<8x192xf32> -> vector<8x192xf32>
    %190 = vector.extract_strided_slice %187 {offsets = [0, 0], sizes = [8, 128], strides = [1, 1]} : vector<8x192xf32> to vector<8x128xf32>
    %191 = vector.extract_strided_slice %189 {offsets = [0, 0], sizes = [8, 128], strides = [1, 1]} : vector<8x192xf32> to vector<8x128xf32>
    %192 = arith.addf %190, %191 : vector<8x128xf32>
    %193 = arith.negf %192 : vector<8x128xf32>
    %194 = math.exp %193 : vector<8x128xf32>
    %cst_52 = arith.constant 1.000000e+00 : f32
    %195 = vector.broadcast %cst_52 : f32 to vector<8x128xf32>
    %196 = arith.addf %195, %194 : vector<8x128xf32>
    %197 = arith.divf %195, %196 : vector<8x128xf32>
    %198 = vector.extract_strided_slice %197 {offsets = [0, 0], sizes = [8, 64], strides = [1, 1]} : vector<8x128xf32> to vector<8x64xf32>
    %199 = vector.extract_strided_slice %197 {offsets = [0, 64], sizes = [8, 64], strides = [1, 1]} : vector<8x128xf32> to vector<8x64xf32>
    %200 = vector.extract_strided_slice %187 {offsets = [0, 128], sizes = [8, 64], strides = [1, 1]} : vector<8x192xf32> to vector<8x64xf32>
    %201 = vector.extract_strided_slice %189 {offsets = [0, 128], sizes = [8, 64], strides = [1, 1]} : vector<8x192xf32> to vector<8x64xf32>
    %202 = arith.addf %201, %10 : vector<8x64xf32>
    %203 = arith.mulf %198, %202 : vector<8x64xf32>
    %204 = arith.addf %200, %203 : vector<8x64xf32>
    %205 = math.tanh %204 : vector<8x64xf32>
    %206 = arith.subf %186, %205 : vector<8x64xf32>
    %207 = arith.mulf %199, %206 : vector<8x64xf32>
    %208 = arith.addf %205, %207 : vector<8x64xf32>
    %209 = arith.subf %208, %186 : vector<8x64xf32>
    %210 = arith.mulf %188, %209 : vector<8x64xf32>
    %211 = arith.addf %186, %210 : vector<8x64xf32>
    %c64 = arith.constant 64 : index
    %c0_53 = arith.constant 0 : index
    %212 = vector.load %arg9[%c64, %c0_53] : memref<128x192xf32, #tpu.memory_space<vmem>>, vector<8x192xf32>
    %c64_54 = arith.constant 64 : index
    %c0_55 = arith.constant 0 : index
    %213 = vector.load %arg1[%c64_54, %c0_55] : memref<128x64xf32, #tpu.memory_space<vmem>>, vector<8x64xf32>
    %cst_56 = arith.constant dense<0.000000e+00> : vector<8x192xf32>
    %214 = tpu.matmul %211, %7, %cst_56 {dimension_numbers = #tpu.dot_dimension_numbers<[1], [0], [0], [1], [0, 0, 1, 1], [], []>} : vector<8x64xf32>, vector<64x192xf32>, vector<8x192xf32> -> vector<8x192xf32>
    %215 = vector.extract_strided_slice %212 {offsets = [0, 0], sizes = [8, 128], strides = [1, 1]} : vector<8x192xf32> to vector<8x128xf32>
    %216 = vector.extract_strided_slice %214 {offsets = [0, 0], sizes = [8, 128], strides = [1, 1]} : vector<8x192xf32> to vector<8x128xf32>
    %217 = arith.addf %215, %216 : vector<8x128xf32>
    %218 = arith.negf %217 : vector<8x128xf32>
    %219 = math.exp %218 : vector<8x128xf32>
    %cst_57 = arith.constant 1.000000e+00 : f32
    %220 = vector.broadcast %cst_57 : f32 to vector<8x128xf32>
    %221 = arith.addf %220, %219 : vector<8x128xf32>
    %222 = arith.divf %220, %221 : vector<8x128xf32>
    %223 = vector.extract_strided_slice %222 {offsets = [0, 0], sizes = [8, 64], strides = [1, 1]} : vector<8x128xf32> to vector<8x64xf32>
    %224 = vector.extract_strided_slice %222 {offsets = [0, 64], sizes = [8, 64], strides = [1, 1]} : vector<8x128xf32> to vector<8x64xf32>
    %225 = vector.extract_strided_slice %212 {offsets = [0, 128], sizes = [8, 64], strides = [1, 1]} : vector<8x192xf32> to vector<8x64xf32>
    %226 = vector.extract_strided_slice %214 {offsets = [0, 128], sizes = [8, 64], strides = [1, 1]} : vector<8x192xf32> to vector<8x64xf32>
    %227 = arith.addf %226, %10 : vector<8x64xf32>
    %228 = arith.mulf %223, %227 : vector<8x64xf32>
    %229 = arith.addf %225, %228 : vector<8x64xf32>
    %230 = math.tanh %229 : vector<8x64xf32>
    %231 = arith.subf %211, %230 : vector<8x64xf32>
    %232 = arith.mulf %224, %231 : vector<8x64xf32>
    %233 = arith.addf %230, %232 : vector<8x64xf32>
    %234 = arith.subf %233, %211 : vector<8x64xf32>
    %235 = arith.mulf %213, %234 : vector<8x64xf32>
    %236 = arith.addf %211, %235 : vector<8x64xf32>
    %c72 = arith.constant 72 : index
    %c0_58 = arith.constant 0 : index
    %237 = vector.load %arg9[%c72, %c0_58] : memref<128x192xf32, #tpu.memory_space<vmem>>, vector<8x192xf32>
    %c72_59 = arith.constant 72 : index
    %c0_60 = arith.constant 0 : index
    %238 = vector.load %arg1[%c72_59, %c0_60] : memref<128x64xf32, #tpu.memory_space<vmem>>, vector<8x64xf32>
    %cst_61 = arith.constant dense<0.000000e+00> : vector<8x192xf32>
    %239 = tpu.matmul %236, %7, %cst_61 {dimension_numbers = #tpu.dot_dimension_numbers<[1], [0], [0], [1], [0, 0, 1, 1], [], []>} : vector<8x64xf32>, vector<64x192xf32>, vector<8x192xf32> -> vector<8x192xf32>
    %240 = vector.extract_strided_slice %237 {offsets = [0, 0], sizes = [8, 128], strides = [1, 1]} : vector<8x192xf32> to vector<8x128xf32>
    %241 = vector.extract_strided_slice %239 {offsets = [0, 0], sizes = [8, 128], strides = [1, 1]} : vector<8x192xf32> to vector<8x128xf32>
    %242 = arith.addf %240, %241 : vector<8x128xf32>
    %243 = arith.negf %242 : vector<8x128xf32>
    %244 = math.exp %243 : vector<8x128xf32>
    %cst_62 = arith.constant 1.000000e+00 : f32
    %245 = vector.broadcast %cst_62 : f32 to vector<8x128xf32>
    %246 = arith.addf %245, %244 : vector<8x128xf32>
    %247 = arith.divf %245, %246 : vector<8x128xf32>
    %248 = vector.extract_strided_slice %247 {offsets = [0, 0], sizes = [8, 64], strides = [1, 1]} : vector<8x128xf32> to vector<8x64xf32>
    %249 = vector.extract_strided_slice %247 {offsets = [0, 64], sizes = [8, 64], strides = [1, 1]} : vector<8x128xf32> to vector<8x64xf32>
    %250 = vector.extract_strided_slice %237 {offsets = [0, 128], sizes = [8, 64], strides = [1, 1]} : vector<8x192xf32> to vector<8x64xf32>
    %251 = vector.extract_strided_slice %239 {offsets = [0, 128], sizes = [8, 64], strides = [1, 1]} : vector<8x192xf32> to vector<8x64xf32>
    %252 = arith.addf %251, %10 : vector<8x64xf32>
    %253 = arith.mulf %248, %252 : vector<8x64xf32>
    %254 = arith.addf %250, %253 : vector<8x64xf32>
    %255 = math.tanh %254 : vector<8x64xf32>
    %256 = arith.subf %236, %255 : vector<8x64xf32>
    %257 = arith.mulf %249, %256 : vector<8x64xf32>
    %258 = arith.addf %255, %257 : vector<8x64xf32>
    %259 = arith.subf %258, %236 : vector<8x64xf32>
    %260 = arith.mulf %238, %259 : vector<8x64xf32>
    %261 = arith.addf %236, %260 : vector<8x64xf32>
    %c80 = arith.constant 80 : index
    %c0_63 = arith.constant 0 : index
    %262 = vector.load %arg9[%c80, %c0_63] : memref<128x192xf32, #tpu.memory_space<vmem>>, vector<8x192xf32>
    %c80_64 = arith.constant 80 : index
    %c0_65 = arith.constant 0 : index
    %263 = vector.load %arg1[%c80_64, %c0_65] : memref<128x64xf32, #tpu.memory_space<vmem>>, vector<8x64xf32>
    %cst_66 = arith.constant dense<0.000000e+00> : vector<8x192xf32>
    %264 = tpu.matmul %261, %7, %cst_66 {dimension_numbers = #tpu.dot_dimension_numbers<[1], [0], [0], [1], [0, 0, 1, 1], [], []>} : vector<8x64xf32>, vector<64x192xf32>, vector<8x192xf32> -> vector<8x192xf32>
    %265 = vector.extract_strided_slice %262 {offsets = [0, 0], sizes = [8, 128], strides = [1, 1]} : vector<8x192xf32> to vector<8x128xf32>
    %266 = vector.extract_strided_slice %264 {offsets = [0, 0], sizes = [8, 128], strides = [1, 1]} : vector<8x192xf32> to vector<8x128xf32>
    %267 = arith.addf %265, %266 : vector<8x128xf32>
    %268 = arith.negf %267 : vector<8x128xf32>
    %269 = math.exp %268 : vector<8x128xf32>
    %cst_67 = arith.constant 1.000000e+00 : f32
    %270 = vector.broadcast %cst_67 : f32 to vector<8x128xf32>
    %271 = arith.addf %270, %269 : vector<8x128xf32>
    %272 = arith.divf %270, %271 : vector<8x128xf32>
    %273 = vector.extract_strided_slice %272 {offsets = [0, 0], sizes = [8, 64], strides = [1, 1]} : vector<8x128xf32> to vector<8x64xf32>
    %274 = vector.extract_strided_slice %272 {offsets = [0, 64], sizes = [8, 64], strides = [1, 1]} : vector<8x128xf32> to vector<8x64xf32>
    %275 = vector.extract_strided_slice %262 {offsets = [0, 128], sizes = [8, 64], strides = [1, 1]} : vector<8x192xf32> to vector<8x64xf32>
    %276 = vector.extract_strided_slice %264 {offsets = [0, 128], sizes = [8, 64], strides = [1, 1]} : vector<8x192xf32> to vector<8x64xf32>
    %277 = arith.addf %276, %10 : vector<8x64xf32>
    %278 = arith.mulf %273, %277 : vector<8x64xf32>
    %279 = arith.addf %275, %278 : vector<8x64xf32>
    %280 = math.tanh %279 : vector<8x64xf32>
    %281 = arith.subf %261, %280 : vector<8x64xf32>
    %282 = arith.mulf %274, %281 : vector<8x64xf32>
    %283 = arith.addf %280, %282 : vector<8x64xf32>
    %284 = arith.subf %283, %261 : vector<8x64xf32>
    %285 = arith.mulf %263, %284 : vector<8x64xf32>
    %286 = arith.addf %261, %285 : vector<8x64xf32>
    %c88 = arith.constant 88 : index
    %c0_68 = arith.constant 0 : index
    %287 = vector.load %arg9[%c88, %c0_68] : memref<128x192xf32, #tpu.memory_space<vmem>>, vector<8x192xf32>
    %c88_69 = arith.constant 88 : index
    %c0_70 = arith.constant 0 : index
    %288 = vector.load %arg1[%c88_69, %c0_70] : memref<128x64xf32, #tpu.memory_space<vmem>>, vector<8x64xf32>
    %cst_71 = arith.constant dense<0.000000e+00> : vector<8x192xf32>
    %289 = tpu.matmul %286, %7, %cst_71 {dimension_numbers = #tpu.dot_dimension_numbers<[1], [0], [0], [1], [0, 0, 1, 1], [], []>} : vector<8x64xf32>, vector<64x192xf32>, vector<8x192xf32> -> vector<8x192xf32>
    %290 = vector.extract_strided_slice %287 {offsets = [0, 0], sizes = [8, 128], strides = [1, 1]} : vector<8x192xf32> to vector<8x128xf32>
    %291 = vector.extract_strided_slice %289 {offsets = [0, 0], sizes = [8, 128], strides = [1, 1]} : vector<8x192xf32> to vector<8x128xf32>
    %292 = arith.addf %290, %291 : vector<8x128xf32>
    %293 = arith.negf %292 : vector<8x128xf32>
    %294 = math.exp %293 : vector<8x128xf32>
    %cst_72 = arith.constant 1.000000e+00 : f32
    %295 = vector.broadcast %cst_72 : f32 to vector<8x128xf32>
    %296 = arith.addf %295, %294 : vector<8x128xf32>
    %297 = arith.divf %295, %296 : vector<8x128xf32>
    %298 = vector.extract_strided_slice %297 {offsets = [0, 0], sizes = [8, 64], strides = [1, 1]} : vector<8x128xf32> to vector<8x64xf32>
    %299 = vector.extract_strided_slice %297 {offsets = [0, 64], sizes = [8, 64], strides = [1, 1]} : vector<8x128xf32> to vector<8x64xf32>
    %300 = vector.extract_strided_slice %287 {offsets = [0, 128], sizes = [8, 64], strides = [1, 1]} : vector<8x192xf32> to vector<8x64xf32>
    %301 = vector.extract_strided_slice %289 {offsets = [0, 128], sizes = [8, 64], strides = [1, 1]} : vector<8x192xf32> to vector<8x64xf32>
    %302 = arith.addf %301, %10 : vector<8x64xf32>
    %303 = arith.mulf %298, %302 : vector<8x64xf32>
    %304 = arith.addf %300, %303 : vector<8x64xf32>
    %305 = math.tanh %304 : vector<8x64xf32>
    %306 = arith.subf %286, %305 : vector<8x64xf32>
    %307 = arith.mulf %299, %306 : vector<8x64xf32>
    %308 = arith.addf %305, %307 : vector<8x64xf32>
    %309 = arith.subf %308, %286 : vector<8x64xf32>
    %310 = arith.mulf %288, %309 : vector<8x64xf32>
    %311 = arith.addf %286, %310 : vector<8x64xf32>
    %c96 = arith.constant 96 : index
    %c0_73 = arith.constant 0 : index
    %312 = vector.load %arg9[%c96, %c0_73] : memref<128x192xf32, #tpu.memory_space<vmem>>, vector<8x192xf32>
    %c96_74 = arith.constant 96 : index
    %c0_75 = arith.constant 0 : index
    %313 = vector.load %arg1[%c96_74, %c0_75] : memref<128x64xf32, #tpu.memory_space<vmem>>, vector<8x64xf32>
    %cst_76 = arith.constant dense<0.000000e+00> : vector<8x192xf32>
    %314 = tpu.matmul %311, %7, %cst_76 {dimension_numbers = #tpu.dot_dimension_numbers<[1], [0], [0], [1], [0, 0, 1, 1], [], []>} : vector<8x64xf32>, vector<64x192xf32>, vector<8x192xf32> -> vector<8x192xf32>
    %315 = vector.extract_strided_slice %312 {offsets = [0, 0], sizes = [8, 128], strides = [1, 1]} : vector<8x192xf32> to vector<8x128xf32>
    %316 = vector.extract_strided_slice %314 {offsets = [0, 0], sizes = [8, 128], strides = [1, 1]} : vector<8x192xf32> to vector<8x128xf32>
    %317 = arith.addf %315, %316 : vector<8x128xf32>
    %318 = arith.negf %317 : vector<8x128xf32>
    %319 = math.exp %318 : vector<8x128xf32>
    %cst_77 = arith.constant 1.000000e+00 : f32
    %320 = vector.broadcast %cst_77 : f32 to vector<8x128xf32>
    %321 = arith.addf %320, %319 : vector<8x128xf32>
    %322 = arith.divf %320, %321 : vector<8x128xf32>
    %323 = vector.extract_strided_slice %322 {offsets = [0, 0], sizes = [8, 64], strides = [1, 1]} : vector<8x128xf32> to vector<8x64xf32>
    %324 = vector.extract_strided_slice %322 {offsets = [0, 64], sizes = [8, 64], strides = [1, 1]} : vector<8x128xf32> to vector<8x64xf32>
    %325 = vector.extract_strided_slice %312 {offsets = [0, 128], sizes = [8, 64], strides = [1, 1]} : vector<8x192xf32> to vector<8x64xf32>
    %326 = vector.extract_strided_slice %314 {offsets = [0, 128], sizes = [8, 64], strides = [1, 1]} : vector<8x192xf32> to vector<8x64xf32>
    %327 = arith.addf %326, %10 : vector<8x64xf32>
    %328 = arith.mulf %323, %327 : vector<8x64xf32>
    %329 = arith.addf %325, %328 : vector<8x64xf32>
    %330 = math.tanh %329 : vector<8x64xf32>
    %331 = arith.subf %311, %330 : vector<8x64xf32>
    %332 = arith.mulf %324, %331 : vector<8x64xf32>
    %333 = arith.addf %330, %332 : vector<8x64xf32>
    %334 = arith.subf %333, %311 : vector<8x64xf32>
    %335 = arith.mulf %313, %334 : vector<8x64xf32>
    %336 = arith.addf %311, %335 : vector<8x64xf32>
    %c104 = arith.constant 104 : index
    %c0_78 = arith.constant 0 : index
    %337 = vector.load %arg9[%c104, %c0_78] : memref<128x192xf32, #tpu.memory_space<vmem>>, vector<8x192xf32>
    %c104_79 = arith.constant 104 : index
    %c0_80 = arith.constant 0 : index
    %338 = vector.load %arg1[%c104_79, %c0_80] : memref<128x64xf32, #tpu.memory_space<vmem>>, vector<8x64xf32>
    %cst_81 = arith.constant dense<0.000000e+00> : vector<8x192xf32>
    %339 = tpu.matmul %336, %7, %cst_81 {dimension_numbers = #tpu.dot_dimension_numbers<[1], [0], [0], [1], [0, 0, 1, 1], [], []>} : vector<8x64xf32>, vector<64x192xf32>, vector<8x192xf32> -> vector<8x192xf32>
    %340 = vector.extract_strided_slice %337 {offsets = [0, 0], sizes = [8, 128], strides = [1, 1]} : vector<8x192xf32> to vector<8x128xf32>
    %341 = vector.extract_strided_slice %339 {offsets = [0, 0], sizes = [8, 128], strides = [1, 1]} : vector<8x192xf32> to vector<8x128xf32>
    %342 = arith.addf %340, %341 : vector<8x128xf32>
    %343 = arith.negf %342 : vector<8x128xf32>
    %344 = math.exp %343 : vector<8x128xf32>
    %cst_82 = arith.constant 1.000000e+00 : f32
    %345 = vector.broadcast %cst_82 : f32 to vector<8x128xf32>
    %346 = arith.addf %345, %344 : vector<8x128xf32>
    %347 = arith.divf %345, %346 : vector<8x128xf32>
    %348 = vector.extract_strided_slice %347 {offsets = [0, 0], sizes = [8, 64], strides = [1, 1]} : vector<8x128xf32> to vector<8x64xf32>
    %349 = vector.extract_strided_slice %347 {offsets = [0, 64], sizes = [8, 64], strides = [1, 1]} : vector<8x128xf32> to vector<8x64xf32>
    %350 = vector.extract_strided_slice %337 {offsets = [0, 128], sizes = [8, 64], strides = [1, 1]} : vector<8x192xf32> to vector<8x64xf32>
    %351 = vector.extract_strided_slice %339 {offsets = [0, 128], sizes = [8, 64], strides = [1, 1]} : vector<8x192xf32> to vector<8x64xf32>
    %352 = arith.addf %351, %10 : vector<8x64xf32>
    %353 = arith.mulf %348, %352 : vector<8x64xf32>
    %354 = arith.addf %350, %353 : vector<8x64xf32>
    %355 = math.tanh %354 : vector<8x64xf32>
    %356 = arith.subf %336, %355 : vector<8x64xf32>
    %357 = arith.mulf %349, %356 : vector<8x64xf32>
    %358 = arith.addf %355, %357 : vector<8x64xf32>
    %359 = arith.subf %358, %336 : vector<8x64xf32>
    %360 = arith.mulf %338, %359 : vector<8x64xf32>
    %361 = arith.addf %336, %360 : vector<8x64xf32>
    %c112 = arith.constant 112 : index
    %c0_83 = arith.constant 0 : index
    %362 = vector.load %arg9[%c112, %c0_83] : memref<128x192xf32, #tpu.memory_space<vmem>>, vector<8x192xf32>
    %c112_84 = arith.constant 112 : index
    %c0_85 = arith.constant 0 : index
    %363 = vector.load %arg1[%c112_84, %c0_85] : memref<128x64xf32, #tpu.memory_space<vmem>>, vector<8x64xf32>
    %cst_86 = arith.constant dense<0.000000e+00> : vector<8x192xf32>
    %364 = tpu.matmul %361, %7, %cst_86 {dimension_numbers = #tpu.dot_dimension_numbers<[1], [0], [0], [1], [0, 0, 1, 1], [], []>} : vector<8x64xf32>, vector<64x192xf32>, vector<8x192xf32> -> vector<8x192xf32>
    %365 = vector.extract_strided_slice %362 {offsets = [0, 0], sizes = [8, 128], strides = [1, 1]} : vector<8x192xf32> to vector<8x128xf32>
    %366 = vector.extract_strided_slice %364 {offsets = [0, 0], sizes = [8, 128], strides = [1, 1]} : vector<8x192xf32> to vector<8x128xf32>
    %367 = arith.addf %365, %366 : vector<8x128xf32>
    %368 = arith.negf %367 : vector<8x128xf32>
    %369 = math.exp %368 : vector<8x128xf32>
    %cst_87 = arith.constant 1.000000e+00 : f32
    %370 = vector.broadcast %cst_87 : f32 to vector<8x128xf32>
    %371 = arith.addf %370, %369 : vector<8x128xf32>
    %372 = arith.divf %370, %371 : vector<8x128xf32>
    %373 = vector.extract_strided_slice %372 {offsets = [0, 0], sizes = [8, 64], strides = [1, 1]} : vector<8x128xf32> to vector<8x64xf32>
    %374 = vector.extract_strided_slice %372 {offsets = [0, 64], sizes = [8, 64], strides = [1, 1]} : vector<8x128xf32> to vector<8x64xf32>
    %375 = vector.extract_strided_slice %362 {offsets = [0, 128], sizes = [8, 64], strides = [1, 1]} : vector<8x192xf32> to vector<8x64xf32>
    %376 = vector.extract_strided_slice %364 {offsets = [0, 128], sizes = [8, 64], strides = [1, 1]} : vector<8x192xf32> to vector<8x64xf32>
    %377 = arith.addf %376, %10 : vector<8x64xf32>
    %378 = arith.mulf %373, %377 : vector<8x64xf32>
    %379 = arith.addf %375, %378 : vector<8x64xf32>
    %380 = math.tanh %379 : vector<8x64xf32>
    %381 = arith.subf %361, %380 : vector<8x64xf32>
    %382 = arith.mulf %374, %381 : vector<8x64xf32>
    %383 = arith.addf %380, %382 : vector<8x64xf32>
    %384 = arith.subf %383, %361 : vector<8x64xf32>
    %385 = arith.mulf %363, %384 : vector<8x64xf32>
    %386 = arith.addf %361, %385 : vector<8x64xf32>
    %c120 = arith.constant 120 : index
    %c0_88 = arith.constant 0 : index
    %387 = vector.load %arg9[%c120, %c0_88] : memref<128x192xf32, #tpu.memory_space<vmem>>, vector<8x192xf32>
    %c120_89 = arith.constant 120 : index
    %c0_90 = arith.constant 0 : index
    %388 = vector.load %arg1[%c120_89, %c0_90] : memref<128x64xf32, #tpu.memory_space<vmem>>, vector<8x64xf32>
    %cst_91 = arith.constant dense<0.000000e+00> : vector<8x192xf32>
    %389 = tpu.matmul %386, %7, %cst_91 {dimension_numbers = #tpu.dot_dimension_numbers<[1], [0], [0], [1], [0, 0, 1, 1], [], []>} : vector<8x64xf32>, vector<64x192xf32>, vector<8x192xf32> -> vector<8x192xf32>
    %390 = vector.extract_strided_slice %387 {offsets = [0, 0], sizes = [8, 128], strides = [1, 1]} : vector<8x192xf32> to vector<8x128xf32>
    %391 = vector.extract_strided_slice %389 {offsets = [0, 0], sizes = [8, 128], strides = [1, 1]} : vector<8x192xf32> to vector<8x128xf32>
    %392 = arith.addf %390, %391 : vector<8x128xf32>
    %393 = arith.negf %392 : vector<8x128xf32>
    %394 = math.exp %393 : vector<8x128xf32>
    %cst_92 = arith.constant 1.000000e+00 : f32
    %395 = vector.broadcast %cst_92 : f32 to vector<8x128xf32>
    %396 = arith.addf %395, %394 : vector<8x128xf32>
    %397 = arith.divf %395, %396 : vector<8x128xf32>
    %398 = vector.extract_strided_slice %397 {offsets = [0, 0], sizes = [8, 64], strides = [1, 1]} : vector<8x128xf32> to vector<8x64xf32>
    %399 = vector.extract_strided_slice %397 {offsets = [0, 64], sizes = [8, 64], strides = [1, 1]} : vector<8x128xf32> to vector<8x64xf32>
    %400 = vector.extract_strided_slice %387 {offsets = [0, 128], sizes = [8, 64], strides = [1, 1]} : vector<8x192xf32> to vector<8x64xf32>
    %401 = vector.extract_strided_slice %389 {offsets = [0, 128], sizes = [8, 64], strides = [1, 1]} : vector<8x192xf32> to vector<8x64xf32>
    %402 = arith.addf %401, %10 : vector<8x64xf32>
    %403 = arith.mulf %398, %402 : vector<8x64xf32>
    %404 = arith.addf %400, %403 : vector<8x64xf32>
    %405 = math.tanh %404 : vector<8x64xf32>
    %406 = arith.subf %386, %405 : vector<8x64xf32>
    %407 = arith.mulf %399, %406 : vector<8x64xf32>
    %408 = arith.addf %405, %407 : vector<8x64xf32>
    %409 = arith.subf %408, %386 : vector<8x64xf32>
    %410 = arith.mulf %388, %409 : vector<8x64xf32>
    %411 = arith.addf %386, %410 : vector<8x64xf32>
    %c0_93 = arith.constant 0 : index
    %c0_94 = arith.constant 0 : index
    %412 = vector.load %arg6[%c0_93, %c0_94] : memref<64x4xf32, #tpu.memory_space<vmem>>, vector<64x4xf32>
    %cst_95 = arith.constant dense<0.000000e+00> : vector<8x4xf32>
    %413 = tpu.matmul %411, %412, %cst_95 {dimension_numbers = #tpu.dot_dimension_numbers<[1], [0], [0], [1], [0, 0, 1, 1], [], []>} : vector<8x64xf32>, vector<64x4xf32>, vector<8x4xf32> -> vector<8x4xf32>
    %c0_96 = arith.constant 0 : index
    %c0_97 = arith.constant 0 : index
    %414 = vector.load %arg7[%c0_96, %c0_97] : memref<1x4xf32, #tpu.memory_space<vmem>>, vector<1x4xf32>
    %415 = vector.broadcast %414 : vector<1x4xf32> to vector<8x4xf32>
    %416 = arith.addf %413, %415 : vector<8x4xf32>
    %c0_98 = arith.constant 0 : index
    %c0_99 = arith.constant 0 : index
    %417 = vector.load %arg8[%c0_98, %c0_99] : memref<8x4xf32, #tpu.memory_space<vmem>>, vector<8x4xf32>
    tpu.vector_store %arg8[%c0_98, %c0_99], %416 {strides = array<i32>} : memref<8x4xf32, #tpu.memory_space<vmem>>, vector<8x4xf32>,
    return
  }
}

</mosaic_0001>

<llo_original>
// kernel: gru_forward.1
$region0: #{gru_forward.1}
  #allocation0 [shape = 'u32[]', space=smem, size = 0x4, offset = 0x4, fixed_abs, tag = 'smem constant byte address 0x4 - core index']
  #allocation1 [shape = 'u32[144,128]{1,0:T(1,128)}', space=vmem, size = 0x12000, scoped, tag = 'internal scratch']
  #allocation2 [shape = 'f32[128,192]{1,0:T(8,128)}', space=vmem, size = 0x20000, scoped, tag = 'scratch operand']
  %s0 = inlined_call_operand.vmem [shape: f32[128,64], index: 0, kind: input, shape index: {}]
  %s1 = inlined_call_operand.vmem [shape: f32[128,64], index: 1, kind: input, shape index: {}]
  %s2 = inlined_call_operand.vmem [shape: f32[64,192], index: 2, kind: input, shape index: {}]
  %s3 = inlined_call_operand.vmem [shape: f32[1,192], index: 3, kind: input, shape index: {}]
  %s4 = inlined_call_operand.vmem [shape: f32[64,192], index: 4, kind: input, shape index: {}]
  %s5 = inlined_call_operand.vmem [shape: f32[1,64], index: 5, kind: input, shape index: {}]
  %s6 = inlined_call_operand.vmem [shape: f32[64,4], index: 6, kind: input, shape index: {}]
  %s7 = inlined_call_operand.vmem [shape: f32[1,4], index: 7, kind: input, shape index: {}]
  %s8 = inlined_call_operand.vmem [shape: f32[8,4], index: 8, kind: output, shape index: {}]
  %s9 = sld [smem:[#allocation0]]
  $region42: #{gru_forward.1} parent=0
    _
  %s11 = ssub.s32 1, %s9
  %s12 = scalar_select 0, %s11, %s9
  // Predicated region
  $region2: #{gru_forward.1} parent=0 // pred_check
    _
  $region3: #{gru_forward.1} parent=0 // pred_check_branch
    %14 = sbr.rel (0) target = $region5
  $region4: #{gru_forward.1} parent=0 // pred_region
    _
  $region5: #{gru_forward.1} parent=0 // pred_fallthru
    _
  // Predicated region
  $region6: #{gru_forward.1} parent=0 // pred_check
    _
  $region7: #{gru_forward.1} parent=0 // pred_check_branch
    %16 = sbr.rel (0) target = $region9
  $region8: #{gru_forward.1} parent=0 // pred_region
    _
  $region9: #{gru_forward.1} parent=0 // pred_fallthru
    _
  // Predicated region
  $region10: #{gru_forward.1} parent=0 // pred_check
    _
  $region11: #{gru_forward.1} parent=0 // pred_check_branch
    %18 = sbr.rel (0) target = $region13
  $region12: #{gru_forward.1} parent=0 // pred_region
    _
  $region13: #{gru_forward.1} parent=0 // pred_fallthru
    _
  // Predicated region
  $region14: #{gru_forward.1} parent=0 // pred_check
    _
  $region15: #{gru_forward.1} parent=0 // pred_check_branch
    %20 = sbr.rel (0) target = $region17
  $region16: #{gru_forward.1} parent=0 // pred_region
    _
  $region17: #{gru_forward.1} parent=0 // pred_fallthru
    _
  // Predicated region
  $region18: #{gru_forward.1} parent=0 // pred_check
    _
  $region19: #{gru_forward.1} parent=0 // pred_check_branch
    %22 = sbr.rel (0) target = $region21
  $region20: #{gru_forward.1} parent=0 // pred_region
    _
  $region21: #{gru_forward.1} parent=0 // pred_fallthru
    _
  // Predicated region
  $region22: #{gru_forward.1} parent=0 // pred_check
    _
  $region23: #{gru_forward.1} parent=0 // pred_check_branch
    %24 = sbr.rel (0) target = $region25
  $region24: #{gru_forward.1} parent=0 // pred_region
    _
  $region25: #{gru_forward.1} parent=0 // pred_fallthru
    _
  // Predicated region
  $region26: #{gru_forward.1} parent=0 // pred_check
    _
  $region27: #{gru_forward.1} parent=0 // pred_check_branch
    %26 = sbr.rel (0) target = $region29
  $region28: #{gru_forward.1} parent=0 // pred_region
    _
  $region29: #{gru_forward.1} parent=0 // pred_fallthru
    _
  // Predicated region
  $region30: #{gru_forward.1} parent=0 // pred_check
    _
  $region31: #{gru_forward.1} parent=0 // pred_check_branch
    %28 = sbr.rel (0) target = $region33
  $region32: #{gru_forward.1} parent=0 // pred_region
    _
  $region33: #{gru_forward.1} parent=0 // pred_fallthru
    _
  %v29 = vld [vmem:[%s0] sm:$0xff]
  %v30 = vld [vmem:[%s0 + $0x8] sm:$0xff]
  %v31 = vld [vmem:[%s0 + $0x10] sm:$0xff]
  %v32 = vld [vmem:[%s0 + $0x18] sm:$0xff]
  %v33 = vld [vmem:[%s0 + $0x20] sm:$0xff]
  %v34 = vld [vmem:[%s0 + $0x28] sm:$0xff]
  %v35 = vld [vmem:[%s0 + $0x30] sm:$0xff]
  %v36 = vld [vmem:[%s0 + $0x38] sm:$0xff]
  %v37 = vld [vmem:[%s0 + $0x40] sm:$0xff]
  %v38 = vld [vmem:[%s0 + $0x48] sm:$0xff]
  %v39 = vld [vmem:[%s0 + $0x50] sm:$0xff]
  %v40 = vld [vmem:[%s0 + $0x58] sm:$0xff]
  %v41 = vld [vmem:[%s0 + $0x60] sm:$0xff]
  %v42 = vld [vmem:[%s0 + $0x68] sm:$0xff]
  %v43 = vld [vmem:[%s0 + $0x70] sm:$0xff]
  %v44 = vld [vmem:[%s0 + $0x78] sm:$0xff]
  %v45 = vld [vmem:[%s2] sm:$0xff]
  %v46 = vld [vmem:[%s2 + $0x8] sm:$0xff]
  %v47 = vld [vmem:[%s2 + $0x10] sm:$0xff]
  %v48 = vld [vmem:[%s2 + $0x18] sm:$0xff]
  %v49 = vld [vmem:[%s2 + $0x20] sm:$0xff]
  %v50 = vld [vmem:[%s2 + $0x28] sm:$0xff]
  %v51 = vld [vmem:[%s2 + $0x30] sm:$0xff]
  %v52 = vld [vmem:[%s2 + $0x38] sm:$0xff]
  %v53 = vld [vmem:[%s2 + $0x40] sm:$0xff]
  %v54 = vld [vmem:[%s2 + $0x48] sm:$0xff]
  %v55 = vld [vmem:[%s2 + $0x50] sm:$0xff]
  %v56 = vld [vmem:[%s2 + $0x58] sm:$0xff]
  %v57 = vld [vmem:[%s2 + $0x60] sm:$0xff]
  %v58 = vld [vmem:[%s2 + $0x68] sm:$0xff]
  %v59 = vld [vmem:[%s2 + $0x70] sm:$0xff]
  %v60 = vld [vmem:[%s2 + $0x78] sm:$0xff]
  %v61 = vld [vmem:[%s3] sm:$0x3]
  %v63 = vlaneseq
  %v64 = vshrl.u32 %v63, 7
  %v65 = vsub.s32 0, %v64
  %v66 = vrot.slane %v61, %v65
  %v67 = vlaneseq
  %v68 = vshrl.u32 %v67, 7
  %v69 = vsub.s32 1, %v68
  %v70 = vrot.slane %v61, %v69
  %vm73 = vcmask 523264
  %v75 = vsel %vm73, %v29, 0
  %v78 = vsel %vm73, %v30, 0
  %v81 = vsel %vm73, %v31, 0
  %v84 = vsel %vm73, %v32, 0
  %v87 = vsel %vm73, %v33, 0
  %v90 = vsel %vm73, %v34, 0
  %v93 = vsel %vm73, %v35, 0
  %v96 = vsel %vm73, %v36, 0
  %v99 = vsel %vm73, %v37, 0
  %v102 = vsel %vm73, %v38, 0
  %v105 = vsel %vm73, %v39, 0
  %v108 = vsel %vm73, %v40, 0
  %v111 = vsel %vm73, %v41, 0
  %v114 = vsel %vm73, %v42, 0
  %v117 = vsel %vm73, %v43, 0
  %v120 = vsel %vm73, %v44, 0
  %122 = vmatprep.subr.mxu0 %v46
  %123 = vmatpush1.msra.mxu0 %v45
  %124 = vmatprep.subr.mxu0 %v48
  %125 = vmatpush1.msra.mxu0 %v47
  %126 = vmatprep.subr.mxu0 %v50
  %127 = vmatpush1.msra.mxu0 %v49
  %128 = vmatprep.subr.mxu0 %v52
  %129 = vmatpush1.msra.mxu0 %v51
  %130 = vmatprep.subr.mxu0 %v54
  %131 = vmatpush1.msra.mxu0 %v53
  %132 = vmatprep.subr.mxu0 %v56
  %133 = vmatpush1.msra.mxu0 %v55
  %134 = vmatprep.subr.mxu0 %v58
  %135 = vmatpush1.msra.mxu0 %v57
  %136 = vmatprep.subr.mxu0 %v60
  %137 = vmatpush1.msra.mxu0 %v59
  %138 = vmatprep.subr.mxu0 0.0
  %139 = vmatpush1.msra.mxu0 0.0
  %140 = vmatprep.subr.mxu0 0.0
  %141 = vmatpush1.msra.mxu0 0.0
  %142 = vmatprep.subr.mxu0 0.0
  %143 = vmatpush1.msra.mxu0 0.0
  %144 = vmatprep.subr.mxu0 0.0
  %145 = vmatpush1.msra.mxu0 0.0
  %146 = vmatprep.subr.mxu0 0.0
  %147 = vmatpush1.msra.mxu0 0.0
  %148 = vmatprep.subr.mxu0 0.0
  %149 = vmatpush1.msra.mxu0 0.0
  %150 = vmatprep.subr.mxu0 0.0
  %151 = vmatpush1.msra.mxu0 0.0
  %152 = vmatprep.subr.mxu0 0.0
  %153 = vmatpush1.msra.mxu0 0.0
  %154 = vmatprep.subr.mxu0 0.0
  %155 = vmatpush1.msra.mxu0 0.0
  %156 = vmatprep.subr.mxu0 0.0
  %157 = vmatpush1.msra.mxu0 0.0
  %158 = vmatprep.subr.mxu0 0.0
  %159 = vmatpush1.msra.mxu0 0.0
  %160 = vmatprep.subr.mxu0 0.0
  %161 = vmatpush1.msra.mxu0 0.0
  %162 = vmatprep.subr.mxu0 0.0
  %163 = vmatpush1.msra.mxu0 0.0
  %164 = vmatprep.subr.mxu0 0.0
  %165 = vmatpush1.msra.mxu0 0.0
  %166 = vmatprep.subr.mxu0 0.0
  %167 = vmatpush1.msra.mxu0 0.0
  %168 = vmatprep.subr.mxu0 0.0
  %169 = vmatpush1.msra.mxu0 0.0
  %170 = vmatprep.subr.mxu0 0.0
  %171 = vmatpush1.msra.mxu0 0.0
  %172 = vmatprep.subr.mxu0 0.0
  %173 = vmatpush1.msra.mxu0 0.0
  %174 = vmatprep.subr.mxu0 0.0
  %175 = vmatpush1.msra.mxu0 0.0
  %176 = vmatprep.subr.mxu0 0.0
  %177 = vmatpush1.msra.mxu0 0.0
  %178 = vmatprep.subr.mxu0 0.0
  %179 = vmatpush1.msra.mxu0 0.0
  %180 = vmatprep.subr.mxu0 0.0
  %181 = vmatpush1.msra.mxu0 0.0
  %182 = vmatprep.subr.mxu0 0.0
  %183 = vmatpush1.msra.mxu0 0.0
  %184 = vmatprep.subr.mxu0 0.0
  %185 = vmatpush1.msra.mxu0 0.0
  %186 = vmatprep.mubr.f32.mxu0 0.0
  %187 = vmatmul.mubr.f32.gmra.mrb[0].mxu0 %v75
  %v188 = vpop.f32.mrb[0].mxu0
  %v189 = vadd.f32 %v66, %v188
  %v190 = vpop.f32.mrb[0].mxu0
  %v191 = vadd.f32 %v70, %v190
  %192 = vmatprep.mubr.f32.mxu0 0.0
  %193 = vmatmul.mubr.f32.gmra.mrb[0].mxu0 %v78
  %v194 = vpop.f32.mrb[0].mxu0
  %v195 = vadd.f32 %v66, %v194
  %v196 = vpop.f32.mrb[0].mxu0
  %v197 = vadd.f32 %v70, %v196
  %198 = vmatprep.mubr.f32.mxu0 0.0
  %199 = vmatmul.mubr.f32.gmra.mrb[0].mxu0 %v81
  %v200 = vpop.f32.mrb[0].mxu0
  %v201 = vadd.f32 %v66, %v200
  %v202 = vpop.f32.mrb[0].mxu0
  %v203 = vadd.f32 %v70, %v202
  %204 = vmatprep.mubr.f32.mxu0 0.0
  %205 = vmatmul.mubr.f32.gmra.mrb[0].mxu0 %v84
  %v206 = vpop.f32.mrb[0].mxu0
  %v207 = vadd.f32 %v66, %v206
  %v208 = vpop.f32.mrb[0].mxu0
  %v209 = vadd.f32 %v70, %v208
  %210 = vmatprep.mubr.f32.mxu0 0.0
  %211 = vmatmul.mubr.f32.gmra.mrb[0].mxu0 %v87
  %v212 = vpop.f32.mrb[0].mxu0
  %v213 = vadd.f32 %v66, %v212
  %v214 = vpop.f32.mrb[0].mxu0
  %v215 = vadd.f32 %v70, %v214
  %216 = vmatprep.mubr.f32.mxu0 0.0
  %217 = vmatmul.mubr.f32.gmra.mrb[0].mxu0 %v90
  %v218 = vpop.f32.mrb[0].mxu0
  %v219 = vadd.f32 %v66, %v218
  %v220 = vpop.f32.mrb[0].mxu0
  %v221 = vadd.f32 %v70, %v220
  %222 = vmatprep.mubr.f32.mxu0 0.0
  %223 = vmatmul.mubr.f32.gmra.mrb[0].mxu0 %v93
  %v224 = vpop.f32.mrb[0].mxu0
  %v225 = vadd.f32 %v66, %v224
  %v226 = vpop.f32.mrb[0].mxu0
  %v227 = vadd.f32 %v70, %v226
  %228 = vmatprep.mubr.f32.mxu0 0.0
  %229 = vmatmul.mubr.f32.gmra.mrb[0].mxu0 %v96
  %v230 = vpop.f32.mrb[0].mxu0
  %v231 = vadd.f32 %v66, %v230
  %v232 = vpop.f32.mrb[0].mxu0
  %v233 = vadd.f32 %v70, %v232
  %234 = vmatprep.mubr.f32.mxu0 0.0
  %235 = vmatmul.mubr.f32.gmra.mrb[0].mxu0 %v99
  %v236 = vpop.f32.mrb[0].mxu0
  %v237 = vadd.f32 %v66, %v236
  %v238 = vpop.f32.mrb[0].mxu0
  %v239 = vadd.f32 %v70, %v238
  %240 = vmatprep.mubr.f32.mxu0 0.0
  %241 = vmatmul.mubr.f32.gmra.mrb[0].mxu0 %v102
  %v242 = vpop.f32.mrb[0].mxu0
  %v243 = vadd.f32 %v66, %v242
  %v244 = vpop.f32.mrb[0].mxu0
  %v245 = vadd.f32 %v70, %v244
  %246 = vmatprep.mubr.f32.mxu0 0.0
  %247 = vmatmul.mubr.f32.gmra.mrb[0].mxu0 %v105
  %v248 = vpop.f32.mrb[0].mxu0
  %v249 = vadd.f32 %v66, %v248
  %v250 = vpop.f32.mrb[0].mxu0
  %v251 = vadd.f32 %v70, %v250
  %252 = vmatprep.mubr.f32.mxu0 0.0
  %253 = vmatmul.mubr.f32.gmra.mrb[0].mxu0 %v108
  %v254 = vpop.f32.mrb[0].mxu0
  %v255 = vadd.f32 %v66, %v254
  %v256 = vpop.f32.mrb[0].mxu0
  %v257 = vadd.f32 %v70, %v256
  %258 = vmatprep.mubr.f32.mxu0 0.0
  %259 = vmatmul.mubr.f32.gmra.mrb[0].mxu0 %v111
  %v260 = vpop.f32.mrb[0].mxu0
  %v261 = vadd.f32 %v66, %v260
  %v262 = vpop.f32.mrb[0].mxu0
  %v263 = vadd.f32 %v70, %v262
  %264 = vmatprep.mubr.f32.mxu0 0.0
  %265 = vmatmul.mubr.f32.gmra.mrb[0].mxu0 %v114
  %v266 = vpop.f32.mrb[0].mxu0
  %v267 = vadd.f32 %v66, %v266
  %v268 = vpop.f32.mrb[0].mxu0
  %v269 = vadd.f32 %v70, %v268
  %270 = vmatprep.mubr.f32.mxu0 0.0
  %271 = vmatmul.mubr.f32.gmra.mrb[0].mxu0 %v117
  %v272 = vpop.f32.mrb[0].mxu0
  %v273 = vadd.f32 %v66, %v272
  %v274 = vpop.f32.mrb[0].mxu0
  %v275 = vadd.f32 %v70, %v274
  %276 = vmatprep.mubr.f32.mxu0 0.0
  %277 = vmatmul.mubr.f32.gmra.mrb[0].mxu0 %v120
  %v278 = vpop.f32.mrb[0].mxu0
  %v279 = vadd.f32 %v66, %v278
  %v280 = vpop.f32.mrb[0].mxu0
  %v281 = vadd.f32 %v70, %v280
  %282 = vdwg.mxu0
  %283 = vst [vmem:[#allocation2] sm:$0xff] %v189
  %284 = vst.msk [vmem:[#allocation2 + $0x8] sm:$0xff] %vm73, %v191
  %285 = vst [vmem:[#allocation2 + $0x10] sm:$0xff] %v195
  %286 = vst.msk [vmem:[#allocation2 + $0x18] sm:$0xff] %vm73, %v197
  %287 = vst [vmem:[#allocation2 + $0x20] sm:$0xff] %v201
  %288 = vst.msk [vmem:[#allocation2 + $0x28] sm:$0xff] %vm73, %v203
  %289 = vst [vmem:[#allocation2 + $0x30] sm:$0xff] %v207
  %290 = vst.msk [vmem:[#allocation2 + $0x38] sm:$0xff] %vm73, %v209
  %291 = vst [vmem:[#allocation2 + $0x40] sm:$0xff] %v213
  %292 = vst.msk [vmem:[#allocation2 + $0x48] sm:$0xff] %vm73, %v215
  %293 = vst [vmem:[#allocation2 + $0x50] sm:$0xff] %v219
  %294 = vst.msk [vmem:[#allocation2 + $0x58] sm:$0xff] %vm73, %v221
  %295 = vst [vmem:[#allocation2 + $0x60] sm:$0xff] %v225
  %296 = vst.msk [vmem:[#allocation2 + $0x68] sm:$0xff] %vm73, %v227
  %297 = vst [vmem:[#allocation2 + $0x70] sm:$0xff] %v231
  %298 = vst.msk [vmem:[#allocation2 + $0x78] sm:$0xff] %vm73, %v233
  %299 = vst [vmem:[#allocation2 + $0x80] sm:$0xff] %v237
  %300 = vst.msk [vmem:[#allocation2 + $0x88] sm:$0xff] %vm73, %v239
  %301 = vst [vmem:[#allocation2 + $0x90] sm:$0xff] %v243
  %302 = vst.msk [vmem:[#allocation2 + $0x98] sm:$0xff] %vm73, %v245
  %303 = vst [vmem:[#allocation2 + $0xa0] sm:$0xff] %v249
  %304 = vst.msk [vmem:[#allocation2 + $0xa8] sm:$0xff] %vm73, %v251
  %305 = vst [vmem:[#allocation2 + $0xb0] sm:$0xff] %v255
  %306 = vst.msk [vmem:[#allocation2 + $0xb8] sm:$0xff] %vm73, %v257
  %307 = vst [vmem:[#allocation2 + $0xc0] sm:$0xff] %v261
  %308 = vst.msk [vmem:[#allocation2 + $0xc8] sm:$0xff] %vm73, %v263
  %309 = vst [vmem:[#allocation2 + $0xd0] sm:$0xff] %v267
  %310 = vst.msk [vmem:[#allocation2 + $0xd8] sm:$0xff] %vm73, %v269
  %311 = vst [vmem:[#allocation2 + $0xe0] sm:$0xff] %v273
  %312 = vst.msk [vmem:[#allocation2 + $0xe8] sm:$0xff] %vm73, %v275
  %313 = vst [vmem:[#allocation2 + $0xf0] sm:$0xff] %v279
  %314 = vst.msk [vmem:[#allocation2 + $0xf8] sm:$0xff] %vm73, %v281
  %v315 = vld [vmem:[%s4] sm:$0xff]
  %v316 = vld [vmem:[%s4 + $0x8] sm:$0xff]
  %v317 = vld [vmem:[%s4 + $0x10] sm:$0xff]
  %v318 = vld [vmem:[%s4 + $0x18] sm:$0xff]
  %v319 = vld [vmem:[%s4 + $0x20] sm:$0xff]
  %v320 = vld [vmem:[%s4 + $0x28] sm:$0xff]
  %v321 = vld [vmem:[%s4 + $0x30] sm:$0xff]
  %v322 = vld [vmem:[%s4 + $0x38] sm:$0xff]
  %v323 = vld [vmem:[%s4 + $0x40] sm:$0xff]
  %v324 = vld [vmem:[%s4 + $0x48] sm:$0xff]
  %v325 = vld [vmem:[%s4 + $0x50] sm:$0xff]
  %v326 = vld [vmem:[%s4 + $0x58] sm:$0xff]
  %v327 = vld [vmem:[%s4 + $0x60] sm:$0xff]
  %v328 = vld [vmem:[%s4 + $0x68] sm:$0xff]
  %v329 = vld [vmem:[%s4 + $0x70] sm:$0xff]
  %v330 = vld [vmem:[%s4 + $0x78] sm:$0xff]
  %v331 = vld [vmem:[%s5] sm:$0x1]
  %v333 = vlaneseq
  %v334 = vshrl.u32 %v333, 7
  %v335 = vsub.s32 0, %v334
  %v336 = vrot.slane %v331, %v335
  %v338 = vld [vmem:[#allocation2] sm:$0xff]
  %v339 = vld [vmem:[#allocation2 + $0x8] sm:$0xff]
  %v340 = vld [vmem:[%s1] sm:$0xff]
  %v342 = vsel %vm73, 0.0, 0
  %344 = vmatprep.subr.mxu0 %v316
  %345 = vmatpush1.msra.mxu0 %v315
  %346 = vmatprep.subr.mxu0 %v318
  %347 = vmatpush1.msra.mxu0 %v317
  %348 = vmatprep.subr.mxu0 %v320
  %349 = vmatpush1.msra.mxu0 %v319
  %350 = vmatprep.subr.mxu0 %v322
  %351 = vmatpush1.msra.mxu0 %v321
  %352 = vmatprep.subr.mxu0 %v324
  %353 = vmatpush1.msra.mxu0 %v323
  %354 = vmatprep.subr.mxu0 %v326
  %355 = vmatpush1.msra.mxu0 %v325
  %356 = vmatprep.subr.mxu0 %v328
  %357 = vmatpush1.msra.mxu0 %v327
  %358 = vmatprep.subr.mxu0 %v330
  %359 = vmatpush1.msra.mxu0 %v329
  %360 = vmatprep.subr.mxu0 0.0
  %361 = vmatpush1.msra.mxu0 0.0
  %362 = vmatprep.subr.mxu0 0.0
  %363 = vmatpush1.msra.mxu0 0.0
  %364 = vmatprep.subr.mxu0 0.0
  %365 = vmatpush1.msra.mxu0 0.0
  %366 = vmatprep.subr.mxu0 0.0
  %367 = vmatpush1.msra.mxu0 0.0
  %368 = vmatprep.subr.mxu0 0.0
  %369 = vmatpush1.msra.mxu0 0.0
  %370 = vmatprep.subr.mxu0 0.0
  %371 = vmatpush1.msra.mxu0 0.0
  %372 = vmatprep.subr.mxu0 0.0
  %373 = vmatpush1.msra.mxu0 0.0
  %374 = vmatprep.subr.mxu0 0.0
  %375 = vmatpush1.msra.mxu0 0.0
  %376 = vmatprep.subr.mxu0 0.0
  %377 = vmatpush1.msra.mxu0 0.0
  %378 = vmatprep.subr.mxu0 0.0
  %379 = vmatpush1.msra.mxu0 0.0
  %380 = vmatprep.subr.mxu0 0.0
  %381 = vmatpush1.msra.mxu0 0.0
  %382 = vmatprep.subr.mxu0 0.0
  %383 = vmatpush1.msra.mxu0 0.0
  %384 = vmatprep.subr.mxu0 0.0
  %385 = vmatpush1.msra.mxu0 0.0
  %386 = vmatprep.subr.mxu0 0.0
  %387 = vmatpush1.msra.mxu0 0.0
  %388 = vmatprep.subr.mxu0 0.0
  %389 = vmatpush1.msra.mxu0 0.0
  %390 = vmatprep.subr.mxu0 0.0
  %391 = vmatpush1.msra.mxu0 0.0
  %392 = vmatprep.subr.mxu0 0.0
  %393 = vmatpush1.msra.mxu0 0.0
  %394 = vmatprep.subr.mxu0 0.0
  %395 = vmatpush1.msra.mxu0 0.0
  %396 = vmatprep.subr.mxu0 0.0
  %397 = vmatpush1.msra.mxu0 0.0
  %398 = vmatprep.subr.mxu0 0.0
  %399 = vmatpush1.msra.mxu0 0.0
  %400 = vmatprep.subr.mxu0 0.0
  %401 = vmatpush1.msra.mxu0 0.0
  %402 = vmatprep.subr.mxu0 0.0
  %403 = vmatpush1.msra.mxu0 0.0
  %404 = vmatprep.subr.mxu0 0.0
  %405 = vmatpush1.msra.mxu0 0.0
  %406 = vmatprep.subr.mxu0 0.0
  %407 = vmatpush1.msra.mxu0 0.0
  %408 = vmatprep.mubr.f32.mxu0 0.0
  %409 = vmatmul.mubr.f32.gmra.mrb[0].mxu0 %v342
  %v410 = vpop.f32.mrb[0].mxu0
  %v411 = vadd.f32 0.0, %v410
  %v412 = vpop.f32.mrb[0].mxu0
  %v413 = vadd.f32 0.0, %v412
  %414 = vdwg.mxu0
  %v415 = vadd.f32 %v338, %v411
  %v416 = vxor.u32 %v415, 2147483648
  %v417 = vmul.f32 %v416, 1.442695
  %v418 = vpow.pop %v417
  %v419 = vadd.f32 %v418, 1.0
  %v420 = vrcp.pop %v419
  %v421 = vmul.f32 1.0, %v420
  %v422 = vadd.f32 %v413, %v336
  %v423 = vmul.f32 %v421, %v422
  %v424 = vadd.f32 %v339, %v423
  %v425 = vtanh.pop %v424
  %v426 = vsub.f32 0.0, %v425
  %428 = vrot.lane.b32.xlu0 %v426, 64
  %v429 = vpop.permute.xlu0 %428
  %v431 = vmul.f32 %v421, %v429
  %433 = vrot.lane.b32.xlu0 %v431, 64
  %v434 = vpop.permute.xlu0 %433
  %v436 = vadd.f32 %v425, %v434
  %v437 = vmul.f32 %v340, %v436
  %v438 = vadd.f32 %v437, 0.0
  %v439 = vld [vmem:[#allocation2 + $0x10] sm:$0xff]
  %v440 = vld [vmem:[#allocation2 + $0x18] sm:$0xff]
  %v441 = vld [vmem:[%s1 + $0x8] sm:$0xff]
  %v443 = vsel %vm73, %v438, 0
  %445 = vmatprep.subr.mxu0 %v316
  %446 = vmatpush1.msra.mxu0 %v315
  %447 = vmatprep.subr.mxu0 %v318
  %448 = vmatpush1.msra.mxu0 %v317
  %449 = vmatprep.subr.mxu0 %v320
  %450 = vmatpush1.msra.mxu0 %v319
  %451 = vmatprep.subr.mxu0 %v322
  %452 = vmatpush1.msra.mxu0 %v321
  %453 = vmatprep.subr.mxu0 %v324
  %454 = vmatpush1.msra.mxu0 %v323
  %455 = vmatprep.subr.mxu0 %v326
  %456 = vmatpush1.msra.mxu0 %v325
  %457 = vmatprep.subr.mxu0 %v328
  %458 = vmatpush1.msra.mxu0 %v327
  %459 = vmatprep.subr.mxu0 %v330
  %460 = vmatpush1.msra.mxu0 %v329
  %461 = vmatprep.subr.mxu0 0.0
  %462 = vmatpush1.msra.mxu0 0.0
  %463 = vmatprep.subr.mxu0 0.0
  %464 = vmatpush1.msra.mxu0 0.0
  %465 = vmatprep.subr.mxu0 0.0
  %466 = vmatpush1.msra.mxu0 0.0
  %467 = vmatprep.subr.mxu0 0.0
  %468 = vmatpush1.msra.mxu0 0.0
  %469 = vmatprep.subr.mxu0 0.0
  %470 = vmatpush1.msra.mxu0 0.0
  %471 = vmatprep.subr.mxu0 0.0
  %472 = vmatpush1.msra.mxu0 0.0
  %473 = vmatprep.subr.mxu0 0.0
  %474 = vmatpush1.msra.mxu0 0.0
  %475 = vmatprep.subr.mxu0 0.0
  %476 = vmatpush1.msra.mxu0 0.0
  %477 = vmatprep.subr.mxu0 0.0
  %478 = vmatpush1.msra.mxu0 0.0
  %479 = vmatprep.subr.mxu0 0.0
  %480 = vmatpush1.msra.mxu0 0.0
  %481 = vmatprep.subr.mxu0 0.0
  %482 = vmatpush1.msra.mxu0 0.0
  %483 = vmatprep.subr.mxu0 0.0
  %484 = vmatpush1.msra.mxu0 0.0
  %485 = vmatprep.subr.mxu0 0.0
  %486 = vmatpush1.msra.mxu0 0.0
  %487 = vmatprep.subr.mxu0 0.0
  %488 = vmatpush1.msra.mxu0 0.0
  %489 = vmatprep.subr.mxu0 0.0
  %490 = vmatpush1.msra.mxu0 0.0
  %491 = vmatprep.subr.mxu0 0.0
  %492 = vmatpush1.msra.mxu0 0.0
  %493 = vmatprep.subr.mxu0 0.0
  %494 = vmatpush1.msra.mxu0 0.0
  %495 = vmatprep.subr.mxu0 0.0
  %496 = vmatpush1.msra.mxu0 0.0
  %497 = vmatprep.subr.mxu0 0.0
  %498 = vmatpush1.msra.mxu0 0.0
  %499 = vmatprep.subr.mxu0 0.0
  %500 = vmatpush1.msra.mxu0 0.0
  %501 = vmatprep.subr.mxu0 0.0
  %502 = vmatpush1.msra.mxu0 0.0
  %503 = vmatprep.subr.mxu0 0.0
  %504 = vmatpush1.msra.mxu0 0.0
  %505 = vmatprep.subr.mxu0 0.0
  %506 = vmatpush1.msra.mxu0 0.0
  %507 = vmatprep.subr.mxu0 0.0
  %508 = vmatpush1.msra.mxu0 0.0
  %509 = vmatprep.mubr.f32.mxu0 0.0
  %510 = vmatmul.mubr.f32.gmra.mrb[0].mxu0 %v443
  %v511 = vpop.f32.mrb[0].mxu0
  %v512 = vadd.f32 0.0, %v511
  %v513 = vpop.f32.mrb[0].mxu0
  %v514 = vadd.f32 0.0, %v513
  %515 = vdwg.mxu0
  %v516 = vadd.f32 %v439, %v512
  %v517 = vxor.u32 %v516, 2147483648
  %v518 = vmul.f32 %v517, 1.442695
  %v519 = vpow.pop %v518
  %v520 = vadd.f32 %v519, 1.0
  %v521 = vrcp.pop %v520
  %v522 = vmul.f32 1.0, %v521
  %v523 = vadd.f32 %v514, %v336
  %v524 = vmul.f32 %v522, %v523
  %v525 = vadd.f32 %v440, %v524
  %v526 = vtanh.pop %v525
  %v527 = vsub.f32 %v438, %v526
  %529 = vrot.lane.b32.xlu0 %v527, 64
  %v530 = vpop.permute.xlu0 %529
  %v532 = vmul.f32 %v522, %v530
  %534 = vrot.lane.b32.xlu0 %v532, 64
  %v535 = vpop.permute.xlu0 %534
  %v537 = vadd.f32 %v526, %v535
  %v538 = vsub.f32 %v537, %v438
  %v539 = vmul.f32 %v441, %v538
  %v540 = vadd.f32 %v438, %v539
  %v541 = vld [vmem:[#allocation2 + $0x20] sm:$0xff]
  %v542 = vld [vmem:[#allocation2 + $0x28] sm:$0xff]
  %v543 = vld [vmem:[%s1 + $0x10] sm:$0xff]
  %v545 = vsel %vm73, %v540, 0
  %547 = vmatprep.subr.mxu0 %v316
  %548 = vmatpush1.msra.mxu0 %v315
  %549 = vmatprep.subr.mxu0 %v318
  %550 = vmatpush1.msra.mxu0 %v317
  %551 = vmatprep.subr.mxu0 %v320
  %552 = vmatpush1.msra.mxu0 %v319
  %553 = vmatprep.subr.mxu0 %v322
  %554 = vmatpush1.msra.mxu0 %v321
  %555 = vmatprep.subr.mxu0 %v324
  %556 = vmatpush1.msra.mxu0 %v323
  %557 = vmatprep.subr.mxu0 %v326
  %558 = vmatpush1.msra.mxu0 %v325
  %559 = vmatprep.subr.mxu0 %v328
  %560 = vmatpush1.msra.mxu0 %v327
  %561 = vmatprep.subr.mxu0 %v330
  %562 = vmatpush1.msra.mxu0 %v329
  %563 = vmatprep.subr.mxu0 0.0
  %564 = vmatpush1.msra.mxu0 0.0
  %565 = vmatprep.subr.mxu0 0.0
  %566 = vmatpush1.msra.mxu0 0.0
  %567 = vmatprep.subr.mxu0 0.0
  %568 = vmatpush1.msra.mxu0 0.0
  %569 = vmatprep.subr.mxu0 0.0
  %570 = vmatpush1.msra.mxu0 0.0
  %571 = vmatprep.subr.mxu0 0.0
  %572 = vmatpush1.msra.mxu0 0.0
  %573 = vmatprep.subr.mxu0 0.0
  %574 = vmatpush1.msra.mxu0 0.0
  %575 = vmatprep.subr.mxu0 0.0
  %576 = vmatpush1.msra.mxu0 0.0
  %577 = vmatprep.subr.mxu0 0.0
  %578 = vmatpush1.msra.mxu0 0.0
  %579 = vmatprep.subr.mxu0 0.0
  %580 = vmatpush1.msra.mxu0 0.0
  %581 = vmatprep.subr.mxu0 0.0
  %582 = vmatpush1.msra.mxu0 0.0
  %583 = vmatprep.subr.mxu0 0.0
  %584 = vmatpush1.msra.mxu0 0.0
  %585 = vmatprep.subr.mxu0 0.0
  %586 = vmatpush1.msra.mxu0 0.0
  %587 = vmatprep.subr.mxu0 0.0
  %588 = vmatpush1.msra.mxu0 0.0
  %589 = vmatprep.subr.mxu0 0.0
  %590 = vmatpush1.msra.mxu0 0.0
  %591 = vmatprep.subr.mxu0 0.0
  %592 = vmatpush1.msra.mxu0 0.0
  %593 = vmatprep.subr.mxu0 0.0
  %594 = vmatpush1.msra.mxu0 0.0
  %595 = vmatprep.subr.mxu0 0.0
  %596 = vmatpush1.msra.mxu0 0.0
  %597 = vmatprep.subr.mxu0 0.0
  %598 = vmatpush1.msra.mxu0 0.0
  %599 = vmatprep.subr.mxu0 0.0
  %600 = vmatpush1.msra.mxu0 0.0
  %601 = vmatprep.subr.mxu0 0.0
  %602 = vmatpush1.msra.mxu0 0.0
  %603 = vmatprep.subr.mxu0 0.0
  %604 = vmatpush1.msra.mxu0 0.0
  %605 = vmatprep.subr.mxu0 0.0
  %606 = vmatpush1.msra.mxu0 0.0
  %607 = vmatprep.subr.mxu0 0.0
  %608 = vmatpush1.msra.mxu0 0.0
  %609 = vmatprep.subr.mxu0 0.0
  %610 = vmatpush1.msra.mxu0 0.0
  %611 = vmatprep.mubr.f32.mxu0 0.0
  %612 = vmatmul.mubr.f32.gmra.mrb[0].mxu0 %v545
  %v613 = vpop.f32.mrb[0].mxu0
  %v614 = vadd.f32 0.0, %v613
  %v615 = vpop.f32.mrb[0].mxu0
  %v616 = vadd.f32 0.0, %v615
  %617 = vdwg.mxu0
  %v618 = vadd.f32 %v541, %v614
  %v619 = vxor.u32 %v618, 2147483648
  %v620 = vmul.f32 %v619, 1.442695
  %v621 = vpow.pop %v620
  %v622 = vadd.f32 %v621, 1.0
  %v623 = vrcp.pop %v622
  %v624 = vmul.f32 1.0, %v623
  %v625 = vadd.f32 %v616, %v336
  %v626 = vmul.f32 %v624, %v625
  %v627 = vadd.f32 %v542, %v626
  %v628 = vtanh.pop %v627
  %v629 = vsub.f32 %v540, %v628
  %631 = vrot.lane.b32.xlu0 %v629, 64
  %v632 = vpop.permute.xlu0 %631
  %v634 = vmul.f32 %v624, %v632
  %636 = vrot.lane.b32.xlu0 %v634, 64
  %v637 = vpop.permute.xlu0 %636
  %v639 = vadd.f32 %v628, %v637
  %v640 = vsub.f32 %v639, %v540
  %v641 = vmul.f32 %v543, %v640
  %v642 = vadd.f32 %v540, %v641
  %v643 = vld [vmem:[#allocation2 + $0x30] sm:$0xff]
  %v644 = vld [vmem:[#allocation2 + $0x38] sm:$0xff]
  %v645 = vld [vmem:[%s1 + $0x18] sm:$0xff]
  %v647 = vsel %vm73, %v642, 0
  %649 = vmatprep.subr.mxu0 %v316
  %650 = vmatpush1.msra.mxu0 %v315
  %651 = vmatprep.subr.mxu0 %v318
  %652 = vmatpush1.msra.mxu0 %v317
  %653 = vmatprep.subr.mxu0 %v320
  %654 = vmatpush1.msra.mxu0 %v319
  %655 = vmatprep.subr.mxu0 %v322
  %656 = vmatpush1.msra.mxu0 %v321
  %657 = vmatprep.subr.mxu0 %v324
  %658 = vmatpush1.msra.mxu0 %v323
  %659 = vmatprep.subr.mxu0 %v326
  %660 = vmatpush1.msra.mxu0 %v325
  %661 = vmatprep.subr.mxu0 %v328
  %662 = vmatpush1.msra.mxu0 %v327
  %663 = vmatprep.subr.mxu0 %v330
  %664 = vmatpush1.msra.mxu0 %v329
  %665 = vmatprep.subr.mxu0 0.0
  %666 = vmatpush1.msra.mxu0 0.0
  %667 = vmatprep.subr.mxu0 0.0
  %668 = vmatpush1.msra.mxu0 0.0
  %669 = vmatprep.subr.mxu0 0.0
  %670 = vmatpush1.msra.mxu0 0.0
  %671 = vmatprep.subr.mxu0 0.0
  %672 = vmatpush1.msra.mxu0 0.0
  %673 = vmatprep.subr.mxu0 0.0
  %674 = vmatpush1.msra.mxu0 0.0
  %675 = vmatprep.subr.mxu0 0.0
  %676 = vmatpush1.msra.mxu0 0.0
  %677 = vmatprep.subr.mxu0 0.0
  %678 = vmatpush1.msra.mxu0 0.0
  %679 = vmatprep.subr.mxu0 0.0
  %680 = vmatpush1.msra.mxu0 0.0
  %681 = vmatprep.subr.mxu0 0.0
  %682 = vmatpush1.msra.mxu0 0.0
  %683 = vmatprep.subr.mxu0 0.0
  %684 = vmatpush1.msra.mxu0 0.0
  %685 = vmatprep.subr.mxu0 0.0
  %686 = vmatpush1.msra.mxu0 0.0
  %687 = vmatprep.subr.mxu0 0.0
  %688 = vmatpush1.msra.mxu0 0.0
  %689 = vmatprep.subr.mxu0 0.0
  %690 = vmatpush1.msra.mxu0 0.0
  %691 = vmatprep.subr.mxu0 0.0
  %692 = vmatpush1.msra.mxu0 0.0
  %693 = vmatprep.subr.mxu0 0.0
  %694 = vmatpush1.msra.mxu0 0.0
  %695 = vmatprep.subr.mxu0 0.0
  %696 = vmatpush1.msra.mxu0 0.0
  %697 = vmatprep.subr.mxu0 0.0
  %698 = vmatpush1.msra.mxu0 0.0
  %699 = vmatprep.subr.mxu0 0.0
  %700 = vmatpush1.msra.mxu0 0.0
  %701 = vmatprep.subr.mxu0 0.0
  %702 = vmatpush1.msra.mxu0 0.0
  %703 = vmatprep.subr.mxu0 0.0
  %704 = vmatpush1.msra.mxu0 0.0
  %705 = vmatprep.subr.mxu0 0.0
  %706 = vmatpush1.msra.mxu0 0.0
  %707 = vmatprep.subr.mxu0 0.0
  %708 = vmatpush1.msra.mxu0 0.0
  %709 = vmatprep.subr.mxu0 0.0
  %710 = vmatpush1.msra.mxu0 0.0
  %711 = vmatprep.subr.mxu0 0.0
  %712 = vmatpush1.msra.mxu0 0.0
  %713 = vmatprep.mubr.f32.mxu0 0.0
  %714 = vmatmul.mubr.f32.gmra.mrb[0].mxu0 %v647
  %v715 = vpop.f32.mrb[0].mxu0
  %v716 = vadd.f32 0.0, %v715
  %v717 = vpop.f32.mrb[0].mxu0
  %v718 = vadd.f32 0.0, %v717
  %719 = vdwg.mxu0
  %v720 = vadd.f32 %v643, %v716
  %v721 = vxor.u32 %v720, 2147483648
  %v722 = vmul.f32 %v721, 1.442695
  %v723 = vpow.pop %v722
  %v724 = vadd.f32 %v723, 1.0
  %v725 = vrcp.pop %v724
  %v726 = vmul.f32 1.0, %v725
  %v727 = vadd.f32 %v718, %v336
  %v728 = vmul.f32 %v726, %v727
  %v729 = vadd.f32 %v644, %v728
  %v730 = vtanh.pop %v729
  %v731 = vsub.f32 %v642, %v730
  %733 = vrot.lane.b32.xlu0 %v731, 64
  %v734 = vpop.permute.xlu0 %733
  %v736 = vmul.f32 %v726, %v734
  %738 = vrot.lane.b32.xlu0 %v736, 64
  %v739 = vpop.permute.xlu0 %738
  %v741 = vadd.f32 %v730, %v739
  %v742 = vsub.f32 %v741, %v642
  %v743 = vmul.f32 %v645, %v742
  %v744 = vadd.f32 %v642, %v743
  %v745 = vld [vmem:[#allocation2 + $0x40] sm:$0xff]
  %v746 = vld [vmem:[#allocation2 + $0x48] sm:$0xff]
  %v747 = vld [vmem:[%s1 + $0x20] sm:$0xff]
  %v749 = vsel %vm73, %v744, 0
  %751 = vmatprep.subr.mxu0 %v316
  %752 = vmatpush1.msra.mxu0 %v315
  %753 = vmatprep.subr.mxu0 %v318
  %754 = vmatpush1.msra.mxu0 %v317
  %755 = vmatprep.subr.mxu0 %v320
  %756 = vmatpush1.msra.mxu0 %v319
  %757 = vmatprep.subr.mxu0 %v322
  %758 = vmatpush1.msra.mxu0 %v321
  %759 = vmatprep.subr.mxu0 %v324
  %760 = vmatpush1.msra.mxu0 %v323
  %761 = vmatprep.subr.mxu0 %v326
  %762 = vmatpush1.msra.mxu0 %v325
  %763 = vmatprep.subr.mxu0 %v328
  %764 = vmatpush1.msra.mxu0 %v327
  %765 = vmatprep.subr.mxu0 %v330
  %766 = vmatpush1.msra.mxu0 %v329
  %767 = vmatprep.subr.mxu0 0.0
  %768 = vmatpush1.msra.mxu0 0.0
  %769 = vmatprep.subr.mxu0 0.0
  %770 = vmatpush1.msra.mxu0 0.0
  %771 = vmatprep.subr.mxu0 0.0
  %772 = vmatpush1.msra.mxu0 0.0
  %773 = vmatprep.subr.mxu0 0.0
  %774 = vmatpush1.msra.mxu0 0.0
  %775 = vmatprep.subr.mxu0 0.0
  %776 = vmatpush1.msra.mxu0 0.0
  %777 = vmatprep.subr.mxu0 0.0
  %778 = vmatpush1.msra.mxu0 0.0
  %779 = vmatprep.subr.mxu0 0.0
  %780 = vmatpush1.msra.mxu0 0.0
  %781 = vmatprep.subr.mxu0 0.0
  %782 = vmatpush1.msra.mxu0 0.0
  %783 = vmatprep.subr.mxu0 0.0
  %784 = vmatpush1.msra.mxu0 0.0
  %785 = vmatprep.subr.mxu0 0.0
  %786 = vmatpush1.msra.mxu0 0.0
  %787 = vmatprep.subr.mxu0 0.0
  %788 = vmatpush1.msra.mxu0 0.0
  %789 = vmatprep.subr.mxu0 0.0
  %790 = vmatpush1.msra.mxu0 0.0
  %791 = vmatprep.subr.mxu0 0.0
  %792 = vmatpush1.msra.mxu0 0.0
  %793 = vmatprep.subr.mxu0 0.0
  %794 = vmatpush1.msra.mxu0 0.0
  %795 = vmatprep.subr.mxu0 0.0
  %796 = vmatpush1.msra.mxu0 0.0
  %797 = vmatprep.subr.mxu0 0.0
  %798 = vmatpush1.msra.mxu0 0.0
  %799 = vmatprep.subr.mxu0 0.0
  %800 = vmatpush1.msra.mxu0 0.0
  %801 = vmatprep.subr.mxu0 0.0
  %802 = vmatpush1.msra.mxu0 0.0
  %803 = vmatprep.subr.mxu0 0.0
  %804 = vmatpush1.msra.mxu0 0.0
  %805 = vmatprep.subr.mxu0 0.0
  %806 = vmatpush1.msra.mxu0 0.0
  %807 = vmatprep.subr.mxu0 0.0
  %808 = vmatpush1.msra.mxu0 0.0
  %809 = vmatprep.subr.mxu0 0.0
  %810 = vmatpush1.msra.mxu0 0.0
  %811 = vmatprep.subr.mxu0 0.0
  %812 = vmatpush1.msra.mxu0 0.0
  %813 = vmatprep.subr.mxu0 0.0
  %814 = vmatpush1.msra.mxu0 0.0
  %815 = vmatprep.mubr.f32.mxu0 0.0
  %816 = vmatmul.mubr.f32.gmra.mrb[0].mxu0 %v749
  %v817 = vpop.f32.mrb[0].mxu0
  %v818 = vadd.f32 0.0, %v817
  %v819 = vpop.f32.mrb[0].mxu0
  %v820 = vadd.f32 0.0, %v819
  %821 = vdwg.mxu0
  %v822 = vadd.f32 %v745, %v818
  %v823 = vxor.u32 %v822, 2147483648
  %v824 = vmul.f32 %v823, 1.442695
  %v825 = vpow.pop %v824
  %v826 = vadd.f32 %v825, 1.0
  %v827 = vrcp.pop %v826
  %v828 = vmul.f32 1.0, %v827
  %v829 = vadd.f32 %v820, %v336
  %v830 = vmul.f32 %v828, %v829
  %v831 = vadd.f32 %v746, %v830
  %v832 = vtanh.pop %v831
  %v833 = vsub.f32 %v744, %v832
  %835 = vrot.lane.b32.xlu0 %v833, 64
  %v836 = vpop.permute.xlu0 %835
  %v838 = vmul.f32 %v828, %v836
  %840 = vrot.lane.b32.xlu0 %v838, 64
  %v841 = vpop.permute.xlu0 %840
  %v843 = vadd.f32 %v832, %v841
  %v844 = vsub.f32 %v843, %v744
  %v845 = vmul.f32 %v747, %v844
  %v846 = vadd.f32 %v744, %v845
  %v847 = vld [vmem:[#allocation2 + $0x50] sm:$0xff]
  %v848 = vld [vmem:[#allocation2 + $0x58] sm:$0xff]
  %v849 = vld [vmem:[%s1 + $0x28] sm:$0xff]
  %v851 = vsel %vm73, %v846, 0
  %853 = vmatprep.subr.mxu0 %v316
  %854 = vmatpush1.msra.mxu0 %v315
  %855 = vmatprep.subr.mxu0 %v318
  %856 = vmatpush1.msra.mxu0 %v317
  %857 = vmatprep.subr.mxu0 %v320
  %858 = vmatpush1.msra.mxu0 %v319
  %859 = vmatprep.subr.mxu0 %v322
  %860 = vmatpush1.msra.mxu0 %v321
  %861 = vmatprep.subr.mxu0 %v324
  %862 = vmatpush1.msra.mxu0 %v323
  %863 = vmatprep.subr.mxu0 %v326
  %864 = vmatpush1.msra.mxu0 %v325
  %865 = vmatprep.subr.mxu0 %v328
  %866 = vmatpush1.msra.mxu0 %v327
  %867 = vmatprep.subr.mxu0 %v330
  %868 = vmatpush1.msra.mxu0 %v329
  %869 = vmatprep.subr.mxu0 0.0
  %870 = vmatpush1.msra.mxu0 0.0
  %871 = vmatprep.subr.mxu0 0.0
  %872 = vmatpush1.msra.mxu0 0.0
  %873 = vmatprep.subr.mxu0 0.0
  %874 = vmatpush1.msra.mxu0 0.0
  %875 = vmatprep.subr.mxu0 0.0
  %876 = vmatpush1.msra.mxu0 0.0
  %877 = vmatprep.subr.mxu0 0.0
  %878 = vmatpush1.msra.mxu0 0.0
  %879 = vmatprep.subr.mxu0 0.0
  %880 = vmatpush1.msra.mxu0 0.0
  %881 = vmatprep.subr.mxu0 0.0
  %882 = vmatpush1.msra.mxu0 0.0
  %883 = vmatprep.subr.mxu0 0.0
  %884 = vmatpush1.msra.mxu0 0.0
  %885 = vmatprep.subr.mxu0 0.0
  %886 = vmatpush1.msra.mxu0 0.0
  %887 = vmatprep.subr.mxu0 0.0
  %888 = vmatpush1.msra.mxu0 0.0
  %889 = vmatprep.subr.mxu0 0.0
  %890 = vmatpush1.msra.mxu0 0.0
  %891 = vmatprep.subr.mxu0 0.0
  %892 = vmatpush1.msra.mxu0 0.0
  %893 = vmatprep.subr.mxu0 0.0
  %894 = vmatpush1.msra.mxu0 0.0
  %895 = vmatprep.subr.mxu0 0.0
  %896 = vmatpush1.msra.mxu0 0.0
  %897 = vmatprep.subr.mxu0 0.0
  %898 = vmatpush1.msra.mxu0 0.0
  %899 = vmatprep.subr.mxu0 0.0
  %900 = vmatpush1.msra.mxu0 0.0
  %901 = vmatprep.subr.mxu0 0.0
  %902 = vmatpush1.msra.mxu0 0.0
  %903 = vmatprep.subr.mxu0 0.0
  %904 = vmatpush1.msra.mxu0 0.0
  %905 = vmatprep.subr.mxu0 0.0
  %906 = vmatpush1.msra.mxu0 0.0
  %907 = vmatprep.subr.mxu0 0.0
  %908 = vmatpush1.msra.mxu0 0.0
  %909 = vmatprep.subr.mxu0 0.0
  %910 = vmatpush1.msra.mxu0 0.0
  %911 = vmatprep.subr.mxu0 0.0
  %912 = vmatpush1.msra.mxu0 0.0
  %913 = vmatprep.subr.mxu0 0.0
  %914 = vmatpush1.msra.mxu0 0.0
  %915 = vmatprep.subr.mxu0 0.0
  %916 = vmatpush1.msra.mxu0 0.0
  %917 = vmatprep.mubr.f32.mxu0 0.0
  %918 = vmatmul.mubr.f32.gmra.mrb[0].mxu0 %v851
  %v919 = vpop.f32.mrb[0].mxu0
  %v920 = vadd.f32 0.0, %v919
  %v921 = vpop.f32.mrb[0].mxu0
  %v922 = vadd.f32 0.0, %v921
  %923 = vdwg.mxu0
  %v924 = vadd.f32 %v847, %v920
  %v925 = vxor.u32 %v924, 2147483648
  %v926 = vmul.f32 %v925, 1.442695
  %v927 = vpow.pop %v926
  %v928 = vadd.f32 %v927, 1.0
  %v929 = vrcp.pop %v928
  %v930 = vmul.f32 1.0, %v929
  %v931 = vadd.f32 %v922, %v336
  %v932 = vmul.f32 %v930, %v931
  %v933 = vadd.f32 %v848, %v932
  %v934 = vtanh.pop %v933
  %v935 = vsub.f32 %v846, %v934
  %937 = vrot.lane.b32.xlu0 %v935, 64
  %v938 = vpop.permute.xlu0 %937
  %v940 = vmul.f32 %v930, %v938
  %942 = vrot.lane.b32.xlu0 %v940, 64
  %v943 = vpop.permute.xlu0 %942
  %v945 = vadd.f32 %v934, %v943
  %v946 = vsub.f32 %v945, %v846
  %v947 = vmul.f32 %v849, %v946
  %v948 = vadd.f32 %v846, %v947
  %v949 = vld [vmem:[#allocation2 + $0x60] sm:$0xff]
  %v950 = vld [vmem:[#allocation2 + $0x68] sm:$0xff]
  %v951 = vld [vmem:[%s1 + $0x30] sm:$0xff]
  %v953 = vsel %vm73, %v948, 0
  %955 = vmatprep.subr.mxu0 %v316
  %956 = vmatpush1.msra.mxu0 %v315
  %957 = vmatprep.subr.mxu0 %v318
  %958 = vmatpush1.msra.mxu0 %v317
  %959 = vmatprep.subr.mxu0 %v320
  %960 = vmatpush1.msra.mxu0 %v319
  %961 = vmatprep.subr.mxu0 %v322
  %962 = vmatpush1.msra.mxu0 %v321
  %963 = vmatprep.subr.mxu0 %v324
  %964 = vmatpush1.msra.mxu0 %v323
  %965 = vmatprep.subr.mxu0 %v326
  %966 = vmatpush1.msra.mxu0 %v325
  %967 = vmatprep.subr.mxu0 %v328
  %968 = vmatpush1.msra.mxu0 %v327
  %969 = vmatprep.subr.mxu0 %v330
  %970 = vmatpush1.msra.mxu0 %v329
  %971 = vmatprep.subr.mxu0 0.0
  %972 = vmatpush1.msra.mxu0 0.0
  %973 = vmatprep.subr.mxu0 0.0
  %974 = vmatpush1.msra.mxu0 0.0
  %975 = vmatprep.subr.mxu0 0.0
  %976 = vmatpush1.msra.mxu0 0.0
  %977 = vmatprep.subr.mxu0 0.0
  %978 = vmatpush1.msra.mxu0 0.0
  %979 = vmatprep.subr.mxu0 0.0
  %980 = vmatpush1.msra.mxu0 0.0
  %981 = vmatprep.subr.mxu0 0.0
  %982 = vmatpush1.msra.mxu0 0.0
  %983 = vmatprep.subr.mxu0 0.0
  %984 = vmatpush1.msra.mxu0 0.0
  %985 = vmatprep.subr.mxu0 0.0
  %986 = vmatpush1.msra.mxu0 0.0
  %987 = vmatprep.subr.mxu0 0.0
  %988 = vmatpush1.msra.mxu0 0.0
  %989 = vmatprep.subr.mxu0 0.0
  %990 = vmatpush1.msra.mxu0 0.0
  %991 = vmatprep.subr.mxu0 0.0
  %992 = vmatpush1.msra.mxu0 0.0
  %993 = vmatprep.subr.mxu0 0.0
  %994 = vmatpush1.msra.mxu0 0.0
  %995 = vmatprep.subr.mxu0 0.0
  %996 = vmatpush1.msra.mxu0 0.0
  %997 = vmatprep.subr.mxu0 0.0
  %998 = vmatpush1.msra.mxu0 0.0
  %999 = vmatprep.subr.mxu0 0.0
  %1000 = vmatpush1.msra.mxu0 0.0
  %1001 = vmatprep.subr.mxu0 0.0
  %1002 = vmatpush1.msra.mxu0 0.0
  %1003 = vmatprep.subr.mxu0 0.0
  %1004 = vmatpush1.msra.mxu0 0.0
  %1005 = vmatprep.subr.mxu0 0.0
  %1006 = vmatpush1.msra.mxu0 0.0
  %1007 = vmatprep.subr.mxu0 0.0
  %1008 = vmatpush1.msra.mxu0 0.0
  %1009 = vmatprep.subr.mxu0 0.0
  %1010 = vmatpush1.msra.mxu0 0.0
  %1011 = vmatprep.subr.mxu0 0.0
  %1012 = vmatpush1.msra.mxu0 0.0
  %1013 = vmatprep.subr.mxu0 0.0
  %1014 = vmatpush1.msra.mxu0 0.0
  %1015 = vmatprep.subr.mxu0 0.0
  %1016 = vmatpush1.msra.mxu0 0.0
  %1017 = vmatprep.subr.mxu0 0.0
  %1018 = vmatpush1.msra.mxu0 0.0
  %1019 = vmatprep.mubr.f32.mxu0 0.0
  %1020 = vmatmul.mubr.f32.gmra.mrb[0].mxu0 %v953
  %v1021 = vpop.f32.mrb[0].mxu0
  %v1022 = vadd.f32 0.0, %v1021
  %v1023 = vpop.f32.mrb[0].mxu0
  %v1024 = vadd.f32 0.0, %v1023
  %1025 = vdwg.mxu0
  %v1026 = vadd.f32 %v949, %v1022
  %v1027 = vxor.u32 %v1026, 2147483648
  %v1028 = vmul.f32 %v1027, 1.442695
  %v1029 = vpow.pop %v1028
  %v1030 = vadd.f32 %v1029, 1.0
  %v1031 = vrcp.pop %v1030
  %v1032 = vmul.f32 1.0, %v1031
  %v1033 = vadd.f32 %v1024, %v336
  %v1034 = vmul.f32 %v1032, %v1033
  %v1035 = vadd.f32 %v950, %v1034
  %v1036 = vtanh.pop %v1035
  %v1037 = vsub.f32 %v948, %v1036
  %1039 = vrot.lane.b32.xlu0 %v1037, 64
  %v1040 = vpop.permute.xlu0 %1039
  %v1042 = vmul.f32 %v1032, %v1040
  %1044 = vrot.lane.b32.xlu0 %v1042, 64
  %v1045 = vpop.permute.xlu0 %1044
  %v1047 = vadd.f32 %v1036, %v1045
  %v1048 = vsub.f32 %v1047, %v948
  %v1049 = vmul.f32 %v951, %v1048
  %v1050 = vadd.f32 %v948, %v1049
  %v1051 = vld [vmem:[#allocation2 + $0x70] sm:$0xff]
  %v1052 = vld [vmem:[#allocation2 + $0x78] sm:$0xff]
  %v1053 = vld [vmem:[%s1 + $0x38] sm:$0xff]
  %v1055 = vsel %vm73, %v1050, 0
  %1057 = vmatprep.subr.mxu0 %v316
  %1058 = vmatpush1.msra.mxu0 %v315
  %1059 = vmatprep.subr.mxu0 %v318
  %1060 = vmatpush1.msra.mxu0 %v317
  %1061 = vmatprep.subr.mxu0 %v320
  %1062 = vmatpush1.msra.mxu0 %v319
  %1063 = vmatprep.subr.mxu0 %v322
  %1064 = vmatpush1.msra.mxu0 %v321
  %1065 = vmatprep.subr.mxu0 %v324
  %1066 = vmatpush1.msra.mxu0 %v323
  %1067 = vmatprep.subr.mxu0 %v326
  %1068 = vmatpush1.msra.mxu0 %v325
  %1069 = vmatprep.subr.mxu0 %v328
  %1070 = vmatpush1.msra.mxu0 %v327
  %1071 = vmatprep.subr.mxu0 %v330
  %1072 = vmatpush1.msra.mxu0 %v329
  %1073 = vmatprep.subr.mxu0 0.0
  %1074 = vmatpush1.msra.mxu0 0.0
  %1075 = vmatprep.subr.mxu0 0.0
  %1076 = vmatpush1.msra.mxu0 0.0
  %1077 = vmatprep.subr.mxu0 0.0
  %1078 = vmatpush1.msra.mxu0 0.0
  %1079 = vmatprep.subr.mxu0 0.0
  %1080 = vmatpush1.msra.mxu0 0.0
  %1081 = vmatprep.subr.mxu0 0.0
  %1082 = vmatpush1.msra.mxu0 0.0
  %1083 = vmatprep.subr.mxu0 0.0
  %1084 = vmatpush1.msra.mxu0 0.0
  %1085 = vmatprep.subr.mxu0 0.0
  %1086 = vmatpush1.msra.mxu0 0.0
  %1087 = vmatprep.subr.mxu0 0.0
  %1088 = vmatpush1.msra.mxu0 0.0
  %1089 = vmatprep.subr.mxu0 0.0
  %1090 = vmatpush1.msra.mxu0 0.0
  %1091 = vmatprep.subr.mxu0 0.0
  %1092 = vmatpush1.msra.mxu0 0.0
  %1093 = vmatprep.subr.mxu0 0.0
  %1094 = vmatpush1.msra.mxu0 0.0
  %1095 = vmatprep.subr.mxu0 0.0
  %1096 = vmatpush1.msra.mxu0 0.0
  %1097 = vmatprep.subr.mxu0 0.0
  %1098 = vmatpush1.msra.mxu0 0.0
  %1099 = vmatprep.subr.mxu0 0.0
  %1100 = vmatpush1.msra.mxu0 0.0
  %1101 = vmatprep.subr.mxu0 0.0
  %1102 = vmatpush1.msra.mxu0 0.0
  %1103 = vmatprep.subr.mxu0 0.0
  %1104 = vmatpush1.msra.mxu0 0.0
  %1105 = vmatprep.subr.mxu0 0.0
  %1106 = vmatpush1.msra.mxu0 0.0
  %1107 = vmatprep.subr.mxu0 0.0
  %1108 = vmatpush1.msra.mxu0 0.0
  %1109 = vmatprep.subr.mxu0 0.0
  %1110 = vmatpush1.msra.mxu0 0.0
  %1111 = vmatprep.subr.mxu0 0.0
  %1112 = vmatpush1.msra.mxu0 0.0
  %1113 = vmatprep.subr.mxu0 0.0
  %1114 = vmatpush1.msra.mxu0 0.0
  %1115 = vmatprep.subr.mxu0 0.0
  %1116 = vmatpush1.msra.mxu0 0.0
  %1117 = vmatprep.subr.mxu0 0.0
  %1118 = vmatpush1.msra.mxu0 0.0
  %1119 = vmatprep.subr.mxu0 0.0
  %1120 = vmatpush1.msra.mxu0 0.0
  %1121 = vmatprep.mubr.f32.mxu0 0.0
  %1122 = vmatmul.mubr.f32.gmra.mrb[0].mxu0 %v1055
  %v1123 = vpop.f32.mrb[0].mxu0
  %v1124 = vadd.f32 0.0, %v1123
  %v1125 = vpop.f32.mrb[0].mxu0
  %v1126 = vadd.f32 0.0, %v1125
  %1127 = vdwg.mxu0
  %v1128 = vadd.f32 %v1051, %v1124
  %v1129 = vxor.u32 %v1128, 2147483648
  %v1130 = vmul.f32 %v1129, 1.442695
  %v1131 = vpow.pop %v1130
  %v1132 = vadd.f32 %v1131, 1.0
  %v1133 = vrcp.pop %v1132
  %v1134 = vmul.f32 1.0, %v1133
  %v1135 = vadd.f32 %v1126, %v336
  %v1136 = vmul.f32 %v1134, %v1135
  %v1137 = vadd.f32 %v1052, %v1136
  %v1138 = vtanh.pop %v1137
  %v1139 = vsub.f32 %v1050, %v1138
  %1141 = vrot.lane.b32.xlu0 %v1139, 64
  %v1142 = vpop.permute.xlu0 %1141
  %v1144 = vmul.f32 %v1134, %v1142
  %1146 = vrot.lane.b32.xlu0 %v1144, 64
  %v1147 = vpop.permute.xlu0 %1146
  %v1149 = vadd.f32 %v1138, %v1147
  %v1150 = vsub.f32 %v1149, %v1050
  %v1151 = vmul.f32 %v1053, %v1150
  %v1152 = vadd.f32 %v1050, %v1151
  %v1153 = vld [vmem:[#allocation2 + $0x80] sm:$0xff]
  %v1154 = vld [vmem:[#allocation2 + $0x88] sm:$0xff]
  %v1155 = vld [vmem:[%s1 + $0x40] sm:$0xff]
  %v1157 = vsel %vm73, %v1152, 0
  %1159 = vmatprep.subr.mxu0 %v316
  %1160 = vmatpush1.msra.mxu0 %v315
  %1161 = vmatprep.subr.mxu0 %v318
  %1162 = vmatpush1.msra.mxu0 %v317
  %1163 = vmatprep.subr.mxu0 %v320
  %1164 = vmatpush1.msra.mxu0 %v319
  %1165 = vmatprep.subr.mxu0 %v322
  %1166 = vmatpush1.msra.mxu0 %v321
  %1167 = vmatprep.subr.mxu0 %v324
  %1168 = vmatpush1.msra.mxu0 %v323
  %1169 = vmatprep.subr.mxu0 %v326
  %1170 = vmatpush1.msra.mxu0 %v325
  %1171 = vmatprep.subr.mxu0 %v328
  %1172 = vmatpush1.msra.mxu0 %v327
  %1173 = vmatprep.subr.mxu0 %v330
  %1174 = vmatpush1.msra.mxu0 %v329
  %1175 = vmatprep.subr.mxu0 0.0
  %1176 = vmatpush1.msra.mxu0 0.0
  %1177 = vmatprep.subr.mxu0 0.0
  %1178 = vmatpush1.msra.mxu0 0.0
  %1179 = vmatprep.subr.mxu0 0.0
  %1180 = vmatpush1.msra.mxu0 0.0
  %1181 = vmatprep.subr.mxu0 0.0
  %1182 = vmatpush1.msra.mxu0 0.0
  %1183 = vmatprep.subr.mxu0 0.0
  %1184 = vmatpush1.msra.mxu0 0.0
  %1185 = vmatprep.subr.mxu0 0.0
  %1186 = vmatpush1.msra.mxu0 0.0
  %1187 = vmatprep.subr.mxu0 0.0
  %1188 = vmatpush1.msra.mxu0 0.0
  %1189 = vmatprep.subr.mxu0 0.0
  %1190 = vmatpush1.msra.mxu0 0.0
  %1191 = vmatprep.subr.mxu0 0.0
  %1192 = vmatpush1.msra.mxu0 0.0
  %1193 = vmatprep.subr.mxu0 0.0
  %1194 = vmatpush1.msra.mxu0 0.0
  %1195 = vmatprep.subr.mxu0 0.0
  %1196 = vmatpush1.msra.mxu0 0.0
  %1197 = vmatprep.subr.mxu0 0.0
  %1198 = vmatpush1.msra.mxu0 0.0
  %1199 = vmatprep.subr.mxu0 0.0
  %1200 = vmatpush1.msra.mxu0 0.0
  %1201 = vmatprep.subr.mxu0 0.0
  %1202 = vmatpush1.msra.mxu0 0.0
  %1203 = vmatprep.subr.mxu0 0.0
  %1204 = vmatpush1.msra.mxu0 0.0
  %1205 = vmatprep.subr.mxu0 0.0
  %1206 = vmatpush1.msra.mxu0 0.0
  %1207 = vmatprep.subr.mxu0 0.0
  %1208 = vmatpush1.msra.mxu0 0.0
  %1209 = vmatprep.subr.mxu0 0.0
  %1210 = vmatpush1.msra.mxu0 0.0
  %1211 = vmatprep.subr.mxu0 0.0
  %1212 = vmatpush1.msra.mxu0 0.0
  %1213 = vmatprep.subr.mxu0 0.0
  %1214 = vmatpush1.msra.mxu0 0.0
  %1215 = vmatprep.subr.mxu0 0.0
  %1216 = vmatpush1.msra.mxu0 0.0
  %1217 = vmatprep.subr.mxu0 0.0
  %1218 = vmatpush1.msra.mxu0 0.0
  %1219 = vmatprep.subr.mxu0 0.0
  %1220 = vmatpush1.msra.mxu0 0.0
  %1221 = vmatprep.subr.mxu0 0.0
  %1222 = vmatpush1.msra.mxu0 0.0
  %1223 = vmatprep.mubr.f32.mxu0 0.0
  %1224 = vmatmul.mubr.f32.gmra.mrb[0].mxu0 %v1157
  %v1225 = vpop.f32.mrb[0].mxu0
  %v1226 = vadd.f32 0.0, %v1225
  %v1227 = vpop.f32.mrb[0].mxu0
  %v1228 = vadd.f32 0.0, %v1227
  %1229 = vdwg.mxu0
  %v1230 = vadd.f32 %v1153, %v1226
  %v1231 = vxor.u32 %v1230, 2147483648
  %v1232 = vmul.f32 %v1231, 1.442695
  %v1233 = vpow.pop %v1232
  %v1234 = vadd.f32 %v1233, 1.0
  %v1235 = vrcp.pop %v1234
  %v1236 = vmul.f32 1.0, %v1235
  %v1237 = vadd.f32 %v1228, %v336
  %v1238 = vmul.f32 %v1236, %v1237
  %v1239 = vadd.f32 %v1154, %v1238
  %v1240 = vtanh.pop %v1239
  %v1241 = vsub.f32 %v1152, %v1240
  %1243 = vrot.lane.b32.xlu0 %v1241, 64
  %v1244 = vpop.permute.xlu0 %1243
  %v1246 = vmul.f32 %v1236, %v1244
  %1248 = vrot.lane.b32.xlu0 %v1246, 64
  %v1249 = vpop.permute.xlu0 %1248
  %v1251 = vadd.f32 %v1240, %v1249
  %v1252 = vsub.f32 %v1251, %v1152
  %v1253 = vmul.f32 %v1155, %v1252
  %v1254 = vadd.f32 %v1152, %v1253
  %v1255 = vld [vmem:[#allocation2 + $0x90] sm:$0xff]
  %v1256 = vld [vmem:[#allocation2 + $0x98] sm:$0xff]
  %v1257 = vld [vmem:[%s1 + $0x48] sm:$0xff]
  %v1259 = vsel %vm73, %v1254, 0
  %1261 = vmatprep.subr.mxu0 %v316
  %1262 = vmatpush1.msra.mxu0 %v315
  %1263 = vmatprep.subr.mxu0 %v318
  %1264 = vmatpush1.msra.mxu0 %v317
  %1265 = vmatprep.subr.mxu0 %v320
  %1266 = vmatpush1.msra.mxu0 %v319
  %1267 = vmatprep.subr.mxu0 %v322
  %1268 = vmatpush1.msra.mxu0 %v321
  %1269 = vmatprep.subr.mxu0 %v324
  %1270 = vmatpush1.msra.mxu0 %v323
  %1271 = vmatprep.subr.mxu0 %v326
  %1272 = vmatpush1.msra.mxu0 %v325
  %1273 = vmatprep.subr.mxu0 %v328
  %1274 = vmatpush1.msra.mxu0 %v327
  %1275 = vmatprep.subr.mxu0 %v330
  %1276 = vmatpush1.msra.mxu0 %v329
  %1277 = vmatprep.subr.mxu0 0.0
  %1278 = vmatpush1.msra.mxu0 0.0
  %1279 = vmatprep.subr.mxu0 0.0
  %1280 = vmatpush1.msra.mxu0 0.0
  %1281 = vmatprep.subr.mxu0 0.0
  %1282 = vmatpush1.msra.mxu0 0.0
  %1283 = vmatprep.subr.mxu0 0.0
  %1284 = vmatpush1.msra.mxu0 0.0
  %1285 = vmatprep.subr.mxu0 0.0
  %1286 = vmatpush1.msra.mxu0 0.0
  %1287 = vmatprep.subr.mxu0 0.0
  %1288 = vmatpush1.msra.mxu0 0.0
  %1289 = vmatprep.subr.mxu0 0.0
  %1290 = vmatpush1.msra.mxu0 0.0
  %1291 = vmatprep.subr.mxu0 0.0
  %1292 = vmatpush1.msra.mxu0 0.0
  %1293 = vmatprep.subr.mxu0 0.0
  %1294 = vmatpush1.msra.mxu0 0.0
  %1295 = vmatprep.subr.mxu0 0.0
  %1296 = vmatpush1.msra.mxu0 0.0
  %1297 = vmatprep.subr.mxu0 0.0
  %1298 = vmatpush1.msra.mxu0 0.0
  %1299 = vmatprep.subr.mxu0 0.0
  %1300 = vmatpush1.msra.mxu0 0.0
  %1301 = vmatprep.subr.mxu0 0.0
  %1302 = vmatpush1.msra.mxu0 0.0
  %1303 = vmatprep.subr.mxu0 0.0
  %1304 = vmatpush1.msra.mxu0 0.0
  %1305 = vmatprep.subr.mxu0 0.0
  %1306 = vmatpush1.msra.mxu0 0.0
  %1307 = vmatprep.subr.mxu0 0.0
  %1308 = vmatpush1.msra.mxu0 0.0
  %1309 = vmatprep.subr.mxu0 0.0
  %1310 = vmatpush1.msra.mxu0 0.0
  %1311 = vmatprep.subr.mxu0 0.0
  %1312 = vmatpush1.msra.mxu0 0.0
  %1313 = vmatprep.subr.mxu0 0.0
  %1314 = vmatpush1.msra.mxu0 0.0
  %1315 = vmatprep.subr.mxu0 0.0
  %1316 = vmatpush1.msra.mxu0 0.0
  %1317 = vmatprep.subr.mxu0 0.0
  %1318 = vmatpush1.msra.mxu0 0.0
  %1319 = vmatprep.subr.mxu0 0.0
  %1320 = vmatpush1.msra.mxu0 0.0
  %1321 = vmatprep.subr.mxu0 0.0
  %1322 = vmatpush1.msra.mxu0 0.0
  %1323 = vmatprep.subr.mxu0 0.0
  %1324 = vmatpush1.msra.mxu0 0.0
  %1325 = vmatprep.mubr.f32.mxu0 0.0
  %1326 = vmatmul.mubr.f32.gmra.mrb[0].mxu0 %v1259
  %v1327 = vpop.f32.mrb[0].mxu0
  %v1328 = vadd.f32 0.0, %v1327
  %v1329 = vpop.f32.mrb[0].mxu0
  %v1330 = vadd.f32 0.0, %v1329
  %1331 = vdwg.mxu0
  %v1332 = vadd.f32 %v1255, %v1328
  %v1333 = vxor.u32 %v1332, 2147483648
  %v1334 = vmul.f32 %v1333, 1.442695
  %v1335 = vpow.pop %v1334
  %v1336 = vadd.f32 %v1335, 1.0
  %v1337 = vrcp.pop %v1336
  %v1338 = vmul.f32 1.0, %v1337
  %v1339 = vadd.f32 %v1330, %v336
  %v1340 = vmul.f32 %v1338, %v1339
  %v1341 = vadd.f32 %v1256, %v1340
  %v1342 = vtanh.pop %v1341
  %v1343 = vsub.f32 %v1254, %v1342
  %1345 = vrot.lane.b32.xlu0 %v1343, 64
  %v1346 = vpop.permute.xlu0 %1345
  %v1348 = vmul.f32 %v1338, %v1346
  %1350 = vrot.lane.b32.xlu0 %v1348, 64
  %v1351 = vpop.permute.xlu0 %1350
  %v1353 = vadd.f32 %v1342, %v1351
  %v1354 = vsub.f32 %v1353, %v1254
  %v1355 = vmul.f32 %v1257, %v1354
  %v1356 = vadd.f32 %v1254, %v1355
  %v1357 = vld [vmem:[#allocation2 + $0xa0] sm:$0xff]
  %v1358 = vld [vmem:[#allocation2 + $0xa8] sm:$0xff]
  %v1359 = vld [vmem:[%s1 + $0x50] sm:$0xff]
  %v1361 = vsel %vm73, %v1356, 0
  %1363 = vmatprep.subr.mxu0 %v316
  %1364 = vmatpush1.msra.mxu0 %v315
  %1365 = vmatprep.subr.mxu0 %v318
  %1366 = vmatpush1.msra.mxu0 %v317
  %1367 = vmatprep.subr.mxu0 %v320
  %1368 = vmatpush1.msra.mxu0 %v319
  %1369 = vmatprep.subr.mxu0 %v322
  %1370 = vmatpush1.msra.mxu0 %v321
  %1371 = vmatprep.subr.mxu0 %v324
  %1372 = vmatpush1.msra.mxu0 %v323
  %1373 = vmatprep.subr.mxu0 %v326
  %1374 = vmatpush1.msra.mxu0 %v325
  %1375 = vmatprep.subr.mxu0 %v328
  %1376 = vmatpush1.msra.mxu0 %v327
  %1377 = vmatprep.subr.mxu0 %v330
  %1378 = vmatpush1.msra.mxu0 %v329
  %1379 = vmatprep.subr.mxu0 0.0
  %1380 = vmatpush1.msra.mxu0 0.0
  %1381 = vmatprep.subr.mxu0 0.0
  %1382 = vmatpush1.msra.mxu0 0.0
  %1383 = vmatprep.subr.mxu0 0.0
  %1384 = vmatpush1.msra.mxu0 0.0
  %1385 = vmatprep.subr.mxu0 0.0
  %1386 = vmatpush1.msra.mxu0 0.0
  %1387 = vmatprep.subr.mxu0 0.0
  %1388 = vmatpush1.msra.mxu0 0.0
  %1389 = vmatprep.subr.mxu0 0.0
  %1390 = vmatpush1.msra.mxu0 0.0
  %1391 = vmatprep.subr.mxu0 0.0
  %1392 = vmatpush1.msra.mxu0 0.0
  %1393 = vmatprep.subr.mxu0 0.0
  %1394 = vmatpush1.msra.mxu0 0.0
  %1395 = vmatprep.subr.mxu0 0.0
  %1396 = vmatpush1.msra.mxu0 0.0
  %1397 = vmatprep.subr.mxu0 0.0
  %1398 = vmatpush1.msra.mxu0 0.0
  %1399 = vmatprep.subr.mxu0 0.0
  %1400 = vmatpush1.msra.mxu0 0.0
  %1401 = vmatprep.subr.mxu0 0.0
  %1402 = vmatpush1.msra.mxu0 0.0
  %1403 = vmatprep.subr.mxu0 0.0
  %1404 = vmatpush1.msra.mxu0 0.0
  %1405 = vmatprep.subr.mxu0 0.0
  %1406 = vmatpush1.msra.mxu0 0.0
  %1407 = vmatprep.subr.mxu0 0.0
  %1408 = vmatpush1.msra.mxu0 0.0
  %1409 = vmatprep.subr.mxu0 0.0
  %1410 = vmatpush1.msra.mxu0 0.0
  %1411 = vmatprep.subr.mxu0 0.0
  %1412 = vmatpush1.msra.mxu0 0.0
  %1413 = vmatprep.subr.mxu0 0.0
  %1414 = vmatpush1.msra.mxu0 0.0
  %1415 = vmatprep.subr.mxu0 0.0
  %1416 = vmatpush1.msra.mxu0 0.0
  %1417 = vmatprep.subr.mxu0 0.0
  %1418 = vmatpush1.msra.mxu0 0.0
  %1419 = vmatprep.subr.mxu0 0.0
  %1420 = vmatpush1.msra.mxu0 0.0
  %1421 = vmatprep.subr.mxu0 0.0
  %1422 = vmatpush1.msra.mxu0 0.0
  %1423 = vmatprep.subr.mxu0 0.0
  %1424 = vmatpush1.msra.mxu0 0.0
  %1425 = vmatprep.subr.mxu0 0.0
  %1426 = vmatpush1.msra.mxu0 0.0
  %1427 = vmatprep.mubr.f32.mxu0 0.0
  %1428 = vmatmul.mubr.f32.gmra.mrb[0].mxu0 %v1361
  %v1429 = vpop.f32.mrb[0].mxu0
  %v1430 = vadd.f32 0.0, %v1429
  %v1431 = vpop.f32.mrb[0].mxu0
  %v1432 = vadd.f32 0.0, %v1431
  %1433 = vdwg.mxu0
  %v1434 = vadd.f32 %v1357, %v1430
  %v1435 = vxor.u32 %v1434, 2147483648
  %v1436 = vmul.f32 %v1435, 1.442695
  %v1437 = vpow.pop %v1436
  %v1438 = vadd.f32 %v1437, 1.0
  %v1439 = vrcp.pop %v1438
  %v1440 = vmul.f32 1.0, %v1439
  %v1441 = vadd.f32 %v1432, %v336
  %v1442 = vmul.f32 %v1440, %v1441
  %v1443 = vadd.f32 %v1358, %v1442
  %v1444 = vtanh.pop %v1443
  %v1445 = vsub.f32 %v1356, %v1444
  %1447 = vrot.lane.b32.xlu0 %v1445, 64
  %v1448 = vpop.permute.xlu0 %1447
  %v1450 = vmul.f32 %v1440, %v1448
  %1452 = vrot.lane.b32.xlu0 %v1450, 64
  %v1453 = vpop.permute.xlu0 %1452
  %v1455 = vadd.f32 %v1444, %v1453
  %v1456 = vsub.f32 %v1455, %v1356
  %v1457 = vmul.f32 %v1359, %v1456
  %v1458 = vadd.f32 %v1356, %v1457
  %v1459 = vld [vmem:[#allocation2 + $0xb0] sm:$0xff]
  %v1460 = vld [vmem:[#allocation2 + $0xb8] sm:$0xff]
  %v1461 = vld [vmem:[%s1 + $0x58] sm:$0xff]
  %v1463 = vsel %vm73, %v1458, 0
  %1465 = vmatprep.subr.mxu0 %v316
  %1466 = vmatpush1.msra.mxu0 %v315
  %1467 = vmatprep.subr.mxu0 %v318
  %1468 = vmatpush1.msra.mxu0 %v317
  %1469 = vmatprep.subr.mxu0 %v320
  %1470 = vmatpush1.msra.mxu0 %v319
  %1471 = vmatprep.subr.mxu0 %v322
  %1472 = vmatpush1.msra.mxu0 %v321
  %1473 = vmatprep.subr.mxu0 %v324
  %1474 = vmatpush1.msra.mxu0 %v323
  %1475 = vmatprep.subr.mxu0 %v326
  %1476 = vmatpush1.msra.mxu0 %v325
  %1477 = vmatprep.subr.mxu0 %v328
  %1478 = vmatpush1.msra.mxu0 %v327
  %1479 = vmatprep.subr.mxu0 %v330
  %1480 = vmatpush1.msra.mxu0 %v329
  %1481 = vmatprep.subr.mxu0 0.0
  %1482 = vmatpush1.msra.mxu0 0.0
  %1483 = vmatprep.subr.mxu0 0.0
  %1484 = vmatpush1.msra.mxu0 0.0
  %1485 = vmatprep.subr.mxu0 0.0
  %1486 = vmatpush1.msra.mxu0 0.0
  %1487 = vmatprep.subr.mxu0 0.0
  %1488 = vmatpush1.msra.mxu0 0.0
  %1489 = vmatprep.subr.mxu0 0.0
  %1490 = vmatpush1.msra.mxu0 0.0
  %1491 = vmatprep.subr.mxu0 0.0
  %1492 = vmatpush1.msra.mxu0 0.0
  %1493 = vmatprep.subr.mxu0 0.0
  %1494 = vmatpush1.msra.mxu0 0.0
  %1495 = vmatprep.subr.mxu0 0.0
  %1496 = vmatpush1.msra.mxu0 0.0
  %1497 = vmatprep.subr.mxu0 0.0
  %1498 = vmatpush1.msra.mxu0 0.0
  %1499 = vmatprep.subr.mxu0 0.0
  %1500 = vmatpush1.msra.mxu0 0.0
  %1501 = vmatprep.subr.mxu0 0.0
  %1502 = vmatpush1.msra.mxu0 0.0
  %1503 = vmatprep.subr.mxu0 0.0
  %1504 = vmatpush1.msra.mxu0 0.0
  %1505 = vmatprep.subr.mxu0 0.0
  %1506 = vmatpush1.msra.mxu0 0.0
  %1507 = vmatprep.subr.mxu0 0.0
  %1508 = vmatpush1.msra.mxu0 0.0
  %1509 = vmatprep.subr.mxu0 0.0
  %1510 = vmatpush1.msra.mxu0 0.0
  %1511 = vmatprep.subr.mxu0 0.0
  %1512 = vmatpush1.msra.mxu0 0.0
  %1513 = vmatprep.subr.mxu0 0.0
  %1514 = vmatpush1.msra.mxu0 0.0
  %1515 = vmatprep.subr.mxu0 0.0
  %1516 = vmatpush1.msra.mxu0 0.0
  %1517 = vmatprep.subr.mxu0 0.0
  %1518 = vmatpush1.msra.mxu0 0.0
  %1519 = vmatprep.subr.mxu0 0.0
  %1520 = vmatpush1.msra.mxu0 0.0
  %1521 = vmatprep.subr.mxu0 0.0
  %1522 = vmatpush1.msra.mxu0 0.0
  %1523 = vmatprep.subr.mxu0 0.0
  %1524 = vmatpush1.msra.mxu0 0.0
  %1525 = vmatprep.subr.mxu0 0.0
  %1526 = vmatpush1.msra.mxu0 0.0
  %1527 = vmatprep.subr.mxu0 0.0
  %1528 = vmatpush1.msra.mxu0 0.0
  %1529 = vmatprep.mubr.f32.mxu0 0.0
  %1530 = vmatmul.mubr.f32.gmra.mrb[0].mxu0 %v1463
  %v1531 = vpop.f32.mrb[0].mxu0
  %v1532 = vadd.f32 0.0, %v1531
  %v1533 = vpop.f32.mrb[0].mxu0
  %v1534 = vadd.f32 0.0, %v1533
  %1535 = vdwg.mxu0
  %v1536 = vadd.f32 %v1459, %v1532
  %v1537 = vxor.u32 %v1536, 2147483648
  %v1538 = vmul.f32 %v1537, 1.442695
  %v1539 = vpow.pop %v1538
  %v1540 = vadd.f32 %v1539, 1.0
  %v1541 = vrcp.pop %v1540
  %v1542 = vmul.f32 1.0, %v1541
  %v1543 = vadd.f32 %v1534, %v336
  %v1544 = vmul.f32 %v1542, %v1543
  %v1545 = vadd.f32 %v1460, %v1544
  %v1546 = vtanh.pop %v1545
  %v1547 = vsub.f32 %v1458, %v1546
  %1549 = vrot.lane.b32.xlu0 %v1547, 64
  %v1550 = vpop.permute.xlu0 %1549
  %v1552 = vmul.f32 %v1542, %v1550
  %1554 = vrot.lane.b32.xlu0 %v1552, 64
  %v1555 = vpop.permute.xlu0 %1554
  %v1557 = vadd.f32 %v1546, %v1555
  %v1558 = vsub.f32 %v1557, %v1458
  %v1559 = vmul.f32 %v1461, %v1558
  %v1560 = vadd.f32 %v1458, %v1559
  %v1561 = vld [vmem:[#allocation2 + $0xc0] sm:$0xff]
  %v1562 = vld [vmem:[#allocation2 + $0xc8] sm:$0xff]
  %v1563 = vld [vmem:[%s1 + $0x60] sm:$0xff]
  %v1565 = vsel %vm73, %v1560, 0
  %1567 = vmatprep.subr.mxu0 %v316
  %1568 = vmatpush1.msra.mxu0 %v315
  %1569 = vmatprep.subr.mxu0 %v318
  %1570 = vmatpush1.msra.mxu0 %v317
  %1571 = vmatprep.subr.mxu0 %v320
  %1572 = vmatpush1.msra.mxu0 %v319
  %1573 = vmatprep.subr.mxu0 %v322
  %1574 = vmatpush1.msra.mxu0 %v321
  %1575 = vmatprep.subr.mxu0 %v324
  %1576 = vmatpush1.msra.mxu0 %v323
  %1577 = vmatprep.subr.mxu0 %v326
  %1578 = vmatpush1.msra.mxu0 %v325
  %1579 = vmatprep.subr.mxu0 %v328
  %1580 = vmatpush1.msra.mxu0 %v327
  %1581 = vmatprep.subr.mxu0 %v330
  %1582 = vmatpush1.msra.mxu0 %v329
  %1583 = vmatprep.subr.mxu0 0.0
  %1584 = vmatpush1.msra.mxu0 0.0
  %1585 = vmatprep.subr.mxu0 0.0
  %1586 = vmatpush1.msra.mxu0 0.0
  %1587 = vmatprep.subr.mxu0 0.0
  %1588 = vmatpush1.msra.mxu0 0.0
  %1589 = vmatprep.subr.mxu0 0.0
  %1590 = vmatpush1.msra.mxu0 0.0
  %1591 = vmatprep.subr.mxu0 0.0
  %1592 = vmatpush1.msra.mxu0 0.0
  %1593 = vmatprep.subr.mxu0 0.0
  %1594 = vmatpush1.msra.mxu0 0.0
  %1595 = vmatprep.subr.mxu0 0.0
  %1596 = vmatpush1.msra.mxu0 0.0
  %1597 = vmatprep.subr.mxu0 0.0
  %1598 = vmatpush1.msra.mxu0 0.0
  %1599 = vmatprep.subr.mxu0 0.0
  %1600 = vmatpush1.msra.mxu0 0.0
  %1601 = vmatprep.subr.mxu0 0.0
  %1602 = vmatpush1.msra.mxu0 0.0
  %1603 = vmatprep.subr.mxu0 0.0
  %1604 = vmatpush1.msra.mxu0 0.0
  %1605 = vmatprep.subr.mxu0 0.0
  %1606 = vmatpush1.msra.mxu0 0.0
  %1607 = vmatprep.subr.mxu0 0.0
  %1608 = vmatpush1.msra.mxu0 0.0
  %1609 = vmatprep.subr.mxu0 0.0
  %1610 = vmatpush1.msra.mxu0 0.0
  %1611 = vmatprep.subr.mxu0 0.0
  %1612 = vmatpush1.msra.mxu0 0.0
  %1613 = vmatprep.subr.mxu0 0.0
  %1614 = vmatpush1.msra.mxu0 0.0
  %1615 = vmatprep.subr.mxu0 0.0
  %1616 = vmatpush1.msra.mxu0 0.0
  %1617 = vmatprep.subr.mxu0 0.0
  %1618 = vmatpush1.msra.mxu0 0.0
  %1619 = vmatprep.subr.mxu0 0.0
  %1620 = vmatpush1.msra.mxu0 0.0
  %1621 = vmatprep.subr.mxu0 0.0
  %1622 = vmatpush1.msra.mxu0 0.0
  %1623 = vmatprep.subr.mxu0 0.0
  %1624 = vmatpush1.msra.mxu0 0.0
  %1625 = vmatprep.subr.mxu0 0.0
  %1626 = vmatpush1.msra.mxu0 0.0
  %1627 = vmatprep.subr.mxu0 0.0
  %1628 = vmatpush1.msra.mxu0 0.0
  %1629 = vmatprep.subr.mxu0 0.0
  %1630 = vmatpush1.msra.mxu0 0.0
  %1631 = vmatprep.mubr.f32.mxu0 0.0
  %1632 = vmatmul.mubr.f32.gmra.mrb[0].mxu0 %v1565
  %v1633 = vpop.f32.mrb[0].mxu0
  %v1634 = vadd.f32 0.0, %v1633
  %v1635 = vpop.f32.mrb[0].mxu0
  %v1636 = vadd.f32 0.0, %v1635
  %1637 = vdwg.mxu0
  %v1638 = vadd.f32 %v1561, %v1634
  %v1639 = vxor.u32 %v1638, 2147483648
  %v1640 = vmul.f32 %v1639, 1.442695
  %v1641 = vpow.pop %v1640
  %v1642 = vadd.f32 %v1641, 1.0
  %v1643 = vrcp.pop %v1642
  %v1644 = vmul.f32 1.0, %v1643
  %v1645 = vadd.f32 %v1636, %v336
  %v1646 = vmul.f32 %v1644, %v1645
  %v1647 = vadd.f32 %v1562, %v1646
  %v1648 = vtanh.pop %v1647
  %v1649 = vsub.f32 %v1560, %v1648
  %1651 = vrot.lane.b32.xlu0 %v1649, 64
  %v1652 = vpop.permute.xlu0 %1651
  %v1654 = vmul.f32 %v1644, %v1652
  %1656 = vrot.lane.b32.xlu0 %v1654, 64
  %v1657 = vpop.permute.xlu0 %1656
  %v1659 = vadd.f32 %v1648, %v1657
  %v1660 = vsub.f32 %v1659, %v1560
  %v1661 = vmul.f32 %v1563, %v1660
  %v1662 = vadd.f32 %v1560, %v1661
  %v1663 = vld [vmem:[#allocation2 + $0xd0] sm:$0xff]
  %v1664 = vld [vmem:[#allocation2 + $0xd8] sm:$0xff]
  %v1665 = vld [vmem:[%s1 + $0x68] sm:$0xff]
  %v1667 = vsel %vm73, %v1662, 0
  %1669 = vmatprep.subr.mxu0 %v316
  %1670 = vmatpush1.msra.mxu0 %v315
  %1671 = vmatprep.subr.mxu0 %v318
  %1672 = vmatpush1.msra.mxu0 %v317
  %1673 = vmatprep.subr.mxu0 %v320
  %1674 = vmatpush1.msra.mxu0 %v319
  %1675 = vmatprep.subr.mxu0 %v322
  %1676 = vmatpush1.msra.mxu0 %v321
  %1677 = vmatprep.subr.mxu0 %v324
  %1678 = vmatpush1.msra.mxu0 %v323
  %1679 = vmatprep.subr.mxu0 %v326
  %1680 = vmatpush1.msra.mxu0 %v325
  %1681 = vmatprep.subr.mxu0 %v328
  %1682 = vmatpush1.msra.mxu0 %v327
  %1683 = vmatprep.subr.mxu0 %v330
  %1684 = vmatpush1.msra.mxu0 %v329
  %1685 = vmatprep.subr.mxu0 0.0
  %1686 = vmatpush1.msra.mxu0 0.0
  %1687 = vmatprep.subr.mxu0 0.0
  %1688 = vmatpush1.msra.mxu0 0.0
  %1689 = vmatprep.subr.mxu0 0.0
  %1690 = vmatpush1.msra.mxu0 0.0
  %1691 = vmatprep.subr.mxu0 0.0
  %1692 = vmatpush1.msra.mxu0 0.0
  %1693 = vmatprep.subr.mxu0 0.0
  %1694 = vmatpush1.msra.mxu0 0.0
  %1695 = vmatprep.subr.mxu0 0.0
  %1696 = vmatpush1.msra.mxu0 0.0
  %1697 = vmatprep.subr.mxu0 0.0
  %1698 = vmatpush1.msra.mxu0 0.0
  %1699 = vmatprep.subr.mxu0 0.0
  %1700 = vmatpush1.msra.mxu0 0.0
  %1701 = vmatprep.subr.mxu0 0.0
  %1702 = vmatpush1.msra.mxu0 0.0
  %1703 = vmatprep.subr.mxu0 0.0
  %1704 = vmatpush1.msra.mxu0 0.0
  %1705 = vmatprep.subr.mxu0 0.0
  %1706 = vmatpush1.msra.mxu0 0.0
  %1707 = vmatprep.subr.mxu0 0.0
  %1708 = vmatpush1.msra.mxu0 0.0
  %1709 = vmatprep.subr.mxu0 0.0
  %1710 = vmatpush1.msra.mxu0 0.0
  %1711 = vmatprep.subr.mxu0 0.0
  %1712 = vmatpush1.msra.mxu0 0.0
  %1713 = vmatprep.subr.mxu0 0.0
  %1714 = vmatpush1.msra.mxu0 0.0
  %1715 = vmatprep.subr.mxu0 0.0
  %1716 = vmatpush1.msra.mxu0 0.0
  %1717 = vmatprep.subr.mxu0 0.0
  %1718 = vmatpush1.msra.mxu0 0.0
  %1719 = vmatprep.subr.mxu0 0.0
  %1720 = vmatpush1.msra.mxu0 0.0
  %1721 = vmatprep.subr.mxu0 0.0
  %1722 = vmatpush1.msra.mxu0 0.0
  %1723 = vmatprep.subr.mxu0 0.0
  %1724 = vmatpush1.msra.mxu0 0.0
  %1725 = vmatprep.subr.mxu0 0.0
  %1726 = vmatpush1.msra.mxu0 0.0
  %1727 = vmatprep.subr.mxu0 0.0
  %1728 = vmatpush1.msra.mxu0 0.0
  %1729 = vmatprep.subr.mxu0 0.0
  %1730 = vmatpush1.msra.mxu0 0.0
  %1731 = vmatprep.subr.mxu0 0.0
  %1732 = vmatpush1.msra.mxu0 0.0
  %1733 = vmatprep.mubr.f32.mxu0 0.0
  %1734 = vmatmul.mubr.f32.gmra.mrb[0].mxu0 %v1667
  %v1735 = vpop.f32.mrb[0].mxu0
  %v1736 = vadd.f32 0.0, %v1735
  %v1737 = vpop.f32.mrb[0].mxu0
  %v1738 = vadd.f32 0.0, %v1737
  %1739 = vdwg.mxu0
  %v1740 = vadd.f32 %v1663, %v1736
  %v1741 = vxor.u32 %v1740, 2147483648
  %v1742 = vmul.f32 %v1741, 1.442695
  %v1743 = vpow.pop %v1742
  %v1744 = vadd.f32 %v1743, 1.0
  %v1745 = vrcp.pop %v1744
  %v1746 = vmul.f32 1.0, %v1745
  %v1747 = vadd.f32 %v1738, %v336
  %v1748 = vmul.f32 %v1746, %v1747
  %v1749 = vadd.f32 %v1664, %v1748
  %v1750 = vtanh.pop %v1749
  %v1751 = vsub.f32 %v1662, %v1750
  %1753 = vrot.lane.b32.xlu0 %v1751, 64
  %v1754 = vpop.permute.xlu0 %1753
  %v1756 = vmul.f32 %v1746, %v1754
  %1758 = vrot.lane.b32.xlu0 %v1756, 64
  %v1759 = vpop.permute.xlu0 %1758
  %v1761 = vadd.f32 %v1750, %v1759
  %v1762 = vsub.f32 %v1761, %v1662
  %v1763 = vmul.f32 %v1665, %v1762
  %v1764 = vadd.f32 %v1662, %v1763
  %v1765 = vld [vmem:[#allocation2 + $0xe0] sm:$0xff]
  %v1766 = vld [vmem:[#allocation2 + $0xe8] sm:$0xff]
  %v1767 = vld [vmem:[%s1 + $0x70] sm:$0xff]
  %v1769 = vsel %vm73, %v1764, 0
  %1771 = vmatprep.subr.mxu0 %v316
  %1772 = vmatpush1.msra.mxu0 %v315
  %1773 = vmatprep.subr.mxu0 %v318
  %1774 = vmatpush1.msra.mxu0 %v317
  %1775 = vmatprep.subr.mxu0 %v320
  %1776 = vmatpush1.msra.mxu0 %v319
  %1777 = vmatprep.subr.mxu0 %v322
  %1778 = vmatpush1.msra.mxu0 %v321
  %1779 = vmatprep.subr.mxu0 %v324
  %1780 = vmatpush1.msra.mxu0 %v323
  %1781 = vmatprep.subr.mxu0 %v326
  %1782 = vmatpush1.msra.mxu0 %v325
  %1783 = vmatprep.subr.mxu0 %v328
  %1784 = vmatpush1.msra.mxu0 %v327
  %1785 = vmatprep.subr.mxu0 %v330
  %1786 = vmatpush1.msra.mxu0 %v329
  %1787 = vmatprep.subr.mxu0 0.0
  %1788 = vmatpush1.msra.mxu0 0.0
  %1789 = vmatprep.subr.mxu0 0.0
  %1790 = vmatpush1.msra.mxu0 0.0
  %1791 = vmatprep.subr.mxu0 0.0
  %1792 = vmatpush1.msra.mxu0 0.0
  %1793 = vmatprep.subr.mxu0 0.0
  %1794 = vmatpush1.msra.mxu0 0.0
  %1795 = vmatprep.subr.mxu0 0.0
  %1796 = vmatpush1.msra.mxu0 0.0
  %1797 = vmatprep.subr.mxu0 0.0
  %1798 = vmatpush1.msra.mxu0 0.0
  %1799 = vmatprep.subr.mxu0 0.0
  %1800 = vmatpush1.msra.mxu0 0.0
  %1801 = vmatprep.subr.mxu0 0.0
  %1802 = vmatpush1.msra.mxu0 0.0
  %1803 = vmatprep.subr.mxu0 0.0
  %1804 = vmatpush1.msra.mxu0 0.0
  %1805 = vmatprep.subr.mxu0 0.0
  %1806 = vmatpush1.msra.mxu0 0.0
  %1807 = vmatprep.subr.mxu0 0.0
  %1808 = vmatpush1.msra.mxu0 0.0
  %1809 = vmatprep.subr.mxu0 0.0
  %1810 = vmatpush1.msra.mxu0 0.0
  %1811 = vmatprep.subr.mxu0 0.0
  %1812 = vmatpush1.msra.mxu0 0.0
  %1813 = vmatprep.subr.mxu0 0.0
  %1814 = vmatpush1.msra.mxu0 0.0
  %1815 = vmatprep.subr.mxu0 0.0
  %1816 = vmatpush1.msra.mxu0 0.0
  %1817 = vmatprep.subr.mxu0 0.0
  %1818 = vmatpush1.msra.mxu0 0.0
  %1819 = vmatprep.subr.mxu0 0.0
  %1820 = vmatpush1.msra.mxu0 0.0
  %1821 = vmatprep.subr.mxu0 0.0
  %1822 = vmatpush1.msra.mxu0 0.0
  %1823 = vmatprep.subr.mxu0 0.0
  %1824 = vmatpush1.msra.mxu0 0.0
  %1825 = vmatprep.subr.mxu0 0.0
  %1826 = vmatpush1.msra.mxu0 0.0
  %1827 = vmatprep.subr.mxu0 0.0
  %1828 = vmatpush1.msra.mxu0 0.0
  %1829 = vmatprep.subr.mxu0 0.0
  %1830 = vmatpush1.msra.mxu0 0.0
  %1831 = vmatprep.subr.mxu0 0.0
  %1832 = vmatpush1.msra.mxu0 0.0
  %1833 = vmatprep.subr.mxu0 0.0
  %1834 = vmatpush1.msra.mxu0 0.0
  %1835 = vmatprep.mubr.f32.mxu0 0.0
  %1836 = vmatmul.mubr.f32.gmra.mrb[0].mxu0 %v1769
  %v1837 = vpop.f32.mrb[0].mxu0
  %v1838 = vadd.f32 0.0, %v1837
  %v1839 = vpop.f32.mrb[0].mxu0
  %v1840 = vadd.f32 0.0, %v1839
  %1841 = vdwg.mxu0
  %v1842 = vadd.f32 %v1765, %v1838
  %v1843 = vxor.u32 %v1842, 2147483648
  %v1844 = vmul.f32 %v1843, 1.442695
  %v1845 = vpow.pop %v1844
  %v1846 = vadd.f32 %v1845, 1.0
  %v1847 = vrcp.pop %v1846
  %v1848 = vmul.f32 1.0, %v1847
  %v1849 = vadd.f32 %v1840, %v336
  %v1850 = vmul.f32 %v1848, %v1849
  %v1851 = vadd.f32 %v1766, %v1850
  %v1852 = vtanh.pop %v1851
  %v1853 = vsub.f32 %v1764, %v1852
  %1855 = vrot.lane.b32.xlu0 %v1853, 64
  %v1856 = vpop.permute.xlu0 %1855
  %v1858 = vmul.f32 %v1848, %v1856
  %1860 = vrot.lane.b32.xlu0 %v1858, 64
  %v1861 = vpop.permute.xlu0 %1860
  %v1863 = vadd.f32 %v1852, %v1861
  %v1864 = vsub.f32 %v1863, %v1764
  %v1865 = vmul.f32 %v1767, %v1864
  %v1866 = vadd.f32 %v1764, %v1865
  %v1867 = vld [vmem:[#allocation2 + $0xf0] sm:$0xff]
  %v1868 = vld [vmem:[#allocation2 + $0xf8] sm:$0xff]
  %v1869 = vld [vmem:[%s1 + $0x78] sm:$0xff]
  %v1871 = vsel %vm73, %v1866, 0
  %1873 = vmatprep.subr.mxu0 %v316
  %1874 = vmatpush1.msra.mxu0 %v315
  %1875 = vmatprep.subr.mxu0 %v318
  %1876 = vmatpush1.msra.mxu0 %v317
  %1877 = vmatprep.subr.mxu0 %v320
  %1878 = vmatpush1.msra.mxu0 %v319
  %1879 = vmatprep.subr.mxu0 %v322
  %1880 = vmatpush1.msra.mxu0 %v321
  %1881 = vmatprep.subr.mxu0 %v324
  %1882 = vmatpush1.msra.mxu0 %v323
  %1883 = vmatprep.subr.mxu0 %v326
  %1884 = vmatpush1.msra.mxu0 %v325
  %1885 = vmatprep.subr.mxu0 %v328
  %1886 = vmatpush1.msra.mxu0 %v327
  %1887 = vmatprep.subr.mxu0 %v330
  %1888 = vmatpush1.msra.mxu0 %v329
  %1889 = vmatprep.subr.mxu0 0.0
  %1890 = vmatpush1.msra.mxu0 0.0
  %1891 = vmatprep.subr.mxu0 0.0
  %1892 = vmatpush1.msra.mxu0 0.0
  %1893 = vmatprep.subr.mxu0 0.0
  %1894 = vmatpush1.msra.mxu0 0.0
  %1895 = vmatprep.subr.mxu0 0.0
  %1896 = vmatpush1.msra.mxu0 0.0
  %1897 = vmatprep.subr.mxu0 0.0
  %1898 = vmatpush1.msra.mxu0 0.0
  %1899 = vmatprep.subr.mxu0 0.0
  %1900 = vmatpush1.msra.mxu0 0.0
  %1901 = vmatprep.subr.mxu0 0.0
  %1902 = vmatpush1.msra.mxu0 0.0
  %1903 = vmatprep.subr.mxu0 0.0
  %1904 = vmatpush1.msra.mxu0 0.0
  %1905 = vmatprep.subr.mxu0 0.0
  %1906 = vmatpush1.msra.mxu0 0.0
  %1907 = vmatprep.subr.mxu0 0.0
  %1908 = vmatpush1.msra.mxu0 0.0
  %1909 = vmatprep.subr.mxu0 0.0
  %1910 = vmatpush1.msra.mxu0 0.0
  %1911 = vmatprep.subr.mxu0 0.0
  %1912 = vmatpush1.msra.mxu0 0.0
  %1913 = vmatprep.subr.mxu0 0.0
  %1914 = vmatpush1.msra.mxu0 0.0
  %1915 = vmatprep.subr.mxu0 0.0
  %1916 = vmatpush1.msra.mxu0 0.0
  %1917 = vmatprep.subr.mxu0 0.0
  %1918 = vmatpush1.msra.mxu0 0.0
  %1919 = vmatprep.subr.mxu0 0.0
  %1920 = vmatpush1.msra.mxu0 0.0
  %1921 = vmatprep.subr.mxu0 0.0
  %1922 = vmatpush1.msra.mxu0 0.0
  %1923 = vmatprep.subr.mxu0 0.0
  %1924 = vmatpush1.msra.mxu0 0.0
  %1925 = vmatprep.subr.mxu0 0.0
  %1926 = vmatpush1.msra.mxu0 0.0
  %1927 = vmatprep.subr.mxu0 0.0
  %1928 = vmatpush1.msra.mxu0 0.0
  %1929 = vmatprep.subr.mxu0 0.0
  %1930 = vmatpush1.msra.mxu0 0.0
  %1931 = vmatprep.subr.mxu0 0.0
  %1932 = vmatpush1.msra.mxu0 0.0
  %1933 = vmatprep.subr.mxu0 0.0
  %1934 = vmatpush1.msra.mxu0 0.0
  %1935 = vmatprep.subr.mxu0 0.0
  %1936 = vmatpush1.msra.mxu0 0.0
  %1937 = vmatprep.mubr.f32.mxu0 0.0
  %1938 = vmatmul.mubr.f32.gmra.mrb[0].mxu0 %v1871
  %v1939 = vpop.f32.mrb[0].mxu0
  %v1940 = vadd.f32 0.0, %v1939
  %v1941 = vpop.f32.mrb[0].mxu0
  %v1942 = vadd.f32 0.0, %v1941
  %1943 = vdwg.mxu0
  %v1944 = vadd.f32 %v1867, %v1940
  %v1945 = vxor.u32 %v1944, 2147483648
  %v1946 = vmul.f32 %v1945, 1.442695
  %v1947 = vpow.pop %v1946
  %v1948 = vadd.f32 %v1947, 1.0
  %v1949 = vrcp.pop %v1948
  %v1950 = vmul.f32 1.0, %v1949
  %v1951 = vadd.f32 %v1942, %v336
  %v1952 = vmul.f32 %v1950, %v1951
  %v1953 = vadd.f32 %v1868, %v1952
  %v1954 = vtanh.pop %v1953
  %v1955 = vsub.f32 %v1866, %v1954
  %1957 = vrot.lane.b32.xlu0 %v1955, 64
  %v1958 = vpop.permute.xlu0 %1957
  %v1960 = vmul.f32 %v1950, %v1958
  %1962 = vrot.lane.b32.xlu0 %v1960, 64
  %v1963 = vpop.permute.xlu0 %1962
  %v1965 = vadd.f32 %v1954, %v1963
  %v1966 = vsub.f32 %v1965, %v1866
  %v1967 = vmul.f32 %v1869, %v1966
  %v1968 = vadd.f32 %v1866, %v1967
  %v1969 = vld [vmem:[%s6] sm:$0xff]
  %v1970 = vld [vmem:[%s6 + $0x8] sm:$0xff]
  %v1971 = vld [vmem:[%s6 + $0x10] sm:$0xff]
  %v1972 = vld [vmem:[%s6 + $0x18] sm:$0xff]
  %v1973 = vld [vmem:[%s6 + $0x20] sm:$0xff]
  %v1974 = vld [vmem:[%s6 + $0x28] sm:$0xff]
  %v1975 = vld [vmem:[%s6 + $0x30] sm:$0xff]
  %v1976 = vld [vmem:[%s6 + $0x38] sm:$0xff]
  %v1977 = vld [vmem:[%s7] sm:$0x1]
  %v1979 = vlaneseq
  %v1980 = vshrl.u32 %v1979, 7
  %v1981 = vsub.s32 0, %v1980
  %v1982 = vrot.slane %v1977, %v1981
  %v1985 = vsel %vm73, %v1968, 0
  %1987 = vmatprep.subr.mxu0 0.0
  %1988 = vmatpush1.msra.mxu0 %v1969
  %1989 = vmatprep.subr.mxu0 0.0
  %1990 = vmatpush1.msra.mxu0 %v1970
  %1991 = vmatprep.subr.mxu0 0.0
  %1992 = vmatpush1.msra.mxu0 %v1971
  %1993 = vmatprep.subr.mxu0 0.0
  %1994 = vmatpush1.msra.mxu0 %v1972
  %1995 = vmatprep.subr.mxu0 0.0
  %1996 = vmatpush1.msra.mxu0 %v1973
  %1997 = vmatprep.subr.mxu0 0.0
  %1998 = vmatpush1.msra.mxu0 %v1974
  %1999 = vmatprep.subr.mxu0 0.0
  %2000 = vmatpush1.msra.mxu0 %v1975
  %2001 = vmatprep.subr.mxu0 0.0
  %2002 = vmatpush1.msra.mxu0 %v1976
  %2003 = vmatprep.subr.mxu0 0.0
  %2004 = vmatpush1.msra.mxu0 0.0
  %2005 = vmatprep.subr.mxu0 0.0
  %2006 = vmatpush1.msra.mxu0 0.0
  %2007 = vmatprep.subr.mxu0 0.0
  %2008 = vmatpush1.msra.mxu0 0.0
  %2009 = vmatprep.subr.mxu0 0.0
  %2010 = vmatpush1.msra.mxu0 0.0
  %2011 = vmatprep.subr.mxu0 0.0
  %2012 = vmatpush1.msra.mxu0 0.0
  %2013 = vmatprep.subr.mxu0 0.0
  %2014 = vmatpush1.msra.mxu0 0.0
  %2015 = vmatprep.subr.mxu0 0.0
  %2016 = vmatpush1.msra.mxu0 0.0
  %2017 = vmatprep.subr.mxu0 0.0
  %2018 = vmatpush1.msra.mxu0 0.0
  %2019 = vmatprep.subr.mxu0 0.0
  %2020 = vmatpush1.msra.mxu0 0.0
  %2021 = vmatprep.subr.mxu0 0.0
  %2022 = vmatpush1.msra.mxu0 0.0
  %2023 = vmatprep.subr.mxu0 0.0
  %2024 = vmatpush1.msra.mxu0 0.0
  %2025 = vmatprep.subr.mxu0 0.0
  %2026 = vmatpush1.msra.mxu0 0.0
  %2027 = vmatprep.subr.mxu0 0.0
  %2028 = vmatpush1.msra.mxu0 0.0
  %2029 = vmatprep.subr.mxu0 0.0
  %2030 = vmatpush1.msra.mxu0 0.0
  %2031 = vmatprep.subr.mxu0 0.0
  %2032 = vmatpush1.msra.mxu0 0.0
  %2033 = vmatprep.subr.mxu0 0.0
  %2034 = vmatpush1.msra.mxu0 0.0
  %2035 = vmatprep.subr.mxu0 0.0
  %2036 = vmatpush1.msra.mxu0 0.0
  %2037 = vmatprep.subr.mxu0 0.0
  %2038 = vmatpush1.msra.mxu0 0.0
  %2039 = vmatprep.subr.mxu0 0.0
  %2040 = vmatpush1.msra.mxu0 0.0
  %2041 = vmatprep.subr.mxu0 0.0
  %2042 = vmatpush1.msra.mxu0 0.0
  %2043 = vmatprep.subr.mxu0 0.0
  %2044 = vmatpush1.msra.mxu0 0.0
  %2045 = vmatprep.subr.mxu0 0.0
  %2046 = vmatpush1.msra.mxu0 0.0
  %2047 = vmatprep.subr.mxu0 0.0
  %2048 = vmatpush1.msra.mxu0 0.0
  %2049 = vmatprep.subr.mxu0 0.0
  %2050 = vmatpush1.msra.mxu0 0.0
  %2051 = vmatprep.mubr.f32.mxu0 0.0
  %2052 = vmatmul.mubr.f32.gmra.mrb[0].mxu0 %v1985
  %v2053 = vpop.f32.mrb[0].mxu0
  %v2054 = vadd.f32 %v1982, %v2053
  %v2055 = vpop.f32.mrb[0].mxu0
  %2056 = vdwg.mxu0
  %vm2057 = vcmask 31744
  %2058 = vst.msk [vmem:[%s8] sm:$0xff] %vm2057, %v2054
  // Predicated region
  $region34: #{gru_forward.1} parent=0 // pred_check
    _
  $region35: #{gru_forward.1} parent=0 // pred_check_branch
    %2060 = sbr.rel (0) target = $region37
  $region36: #{gru_forward.1} parent=0 // pred_region
    _
  $region37: #{gru_forward.1} parent=0 // pred_fallthru
    _
  // Predicated region
  $region38: #{gru_forward.1} parent=0 // pred_check
    _
  $region39: #{gru_forward.1} parent=0 // pred_check_branch
    %2062 = sbr.rel (0) target = $region41
  $region40: #{gru_forward.1} parent=0 // pred_region
    _
  $region41: #{gru_forward.1} parent=0 // pred_fallthru
    _

</llo_original>
